<compile_context>
chip_gen: v5e
topology: v5e:2x2
jax: 0.10.0
libtpu: 0.0.40
codegen_flags: <defaults>
</compile_context>

<pallas_src>
import jax
import jax.numpy as jnp
from jax.experimental import pallas as pl
from jax.experimental.pallas import tpu as pltpu

_VMEM_LIMIT_BYTES = 48 * 1024 * 1024   # > 16/32 MiB defaults, headroom under v7x's 64 MiB
_SQRT_2_OVER_PI = 0.7978845608028654


def _gelu(x):
    # tanh-approximate GELU (PyTorch F.gelu(approximate="tanh")); see TODO above.
    return 0.5 * x * (1.0 + jnp.tanh(_SQRT_2_OVER_PI * (x + 0.044715 * x * x * x)))


# ----------------------------------------------------------------------------
# Pallas kernel: grid = (layer, batch, head_group).  The residual stream for the
# whole batch tile is carried across layers in a VMEM scratch.
# ----------------------------------------------------------------------------
def make_stack_kernel(L, H, nh, heads_per_group):
    dh = H // nh
    hg = heads_per_group
    gd = hg * dh                      # embedding width of one head group

    def _ln(v, p):                    # v: [L, H] f32; p: [2, H] f32 (row0=gamma, row1=beta)
        gamma = p[0:1, :]
        beta = p[1:2, :]
        mu = jnp.mean(v, axis=-1, keepdims=True)
        var = jnp.mean((v - mu) ** 2, axis=-1, keepdims=True)
        return (v - mu) * jax.lax.rsqrt(var + 1e-5) * gamma + beta

    def kernel(x_ref, mask_ref, bias_ref, ln1_ref, wqkv_ref, bqkv_ref, wo_ref, bo_ref,
               ln2_ref, w1_ref, b1_ref, w2_ref, b2_ref, o_ref,
               x_state, h1_state, acc_ref):
        l = pl.program_id(0)          # layer (sequential)
        b = pl.program_id(1)          # batch element within the tile
        g = pl.program_id(2)          # head group (sequential, accumulates into acc_ref)
        last_g = pl.num_programs(2) - 1

        @pl.when((l == 0) & (g == 0))
        def _():                      # load this batch element's activations exactly once
            x_state[b] = x_ref[...].astype(jnp.float32)

        @pl.when(g == 0)
        def _():                      # per-(layer, batch) prologue
            h1_state[...] = _ln(x_state[b], ln1_ref[...]).astype(jnp.bfloat16)
            acc_ref[...] = jnp.zeros_like(acc_ref)

        # ---------------- self-attention, one head group -----------------------------
        h1 = h1_state[...]                                                     # [L, H] bf16
        qkv = jnp.dot(h1, wqkv_ref[g],
                      preferred_element_type=jnp.float32) + bqkv_ref[g]        # [L, 3*gd] f32
        # NOTE: 1/sqrt(dh) is already folded into the Q columns / Q bias.
        q = jnp.swapaxes(qkv[:, 0 * gd:1 * gd].reshape(L, hg, dh), 0, 1)       # [hg, L, dh]
        k = jnp.swapaxes(qkv[:, 1 * gd:2 * gd].reshape(L, hg, dh), 0, 1)
        v = jnp.swapaxes(qkv[:, 2 * gd:3 * gd].reshape(L, hg, dh), 0, 1)

        s = jnp.einsum("hqd,hkd->hqk",
                       q.astype(jnp.bfloat16), k.astype(jnp.bfloat16),
                       preferred_element_type=jnp.float32)                     # [hg, L, L]
        # bias tile converted in-kernel (works for f32 or bf16 producers, no wrapper pass);
        # key-padding uses an additive -1e9 (finite) instead of -inf.
        s = s + bias_ref[...].astype(jnp.float32) + mask_ref[...]
        s = s - jnp.max(s, axis=-1, keepdims=True)
        p = jnp.exp(s)
        denom = jnp.sum(p, axis=-1, keepdims=True)                             # [hg, L, 1]
        ctx = jnp.einsum("hqk,hkd->hqd",
                         p.astype(jnp.bfloat16), v.astype(jnp.bfloat16),
                         preferred_element_type=jnp.float32)                   # [hg, L, dh]
        ctx = ctx / denom                         # deferred (exact) softmax normalization
        ctx2d = jnp.swapaxes(ctx, 0, 1).reshape(L, gd)                         # [L, gd]
        acc_ref[...] += jnp.dot(ctx2d.astype(jnp.bfloat16), wo_ref[g],
                                preferred_element_type=jnp.float32)            # [L, H] f32

        # ---------------- residual + feed-forward (on the last head group) -----------
        @pl.when(g == last_g)
        def _():
            x = x_state[b] + acc_ref[...] + bo_ref[...]
            h2 = _ln(x, ln2_ref[...])
            f = jnp.dot(h2.astype(jnp.bfloat16), w1_ref[...],
                        preferred_element_type=jnp.float32) + b1_ref[...]
            f = _gelu(f)
            x = x + jnp.dot(f.astype(jnp.bfloat16), w2_ref[...],
                            preferred_element_type=jnp.float32) + b2_ref[...]
            x_state[b] = x                        # carry residual stream to the next layer
            o_ref[...] = x.astype(o_ref.dtype)    # lane-dense [L, H] store

    return kernel


# ----------------------------------------------------------------------------
# PSMEncoder.forward equivalent (single fused pallas_call over all layers)
# ----------------------------------------------------------------------------
@jax.jit
def psm_encoder_forward(x_lbh, padding_mask, mixed_attn_bias, stacked):
    """x_lbh: [L,B,H] f32; padding_mask: [B,L] (True=pad);
    mixed_attn_bias: [num_layers,B,nh,L,L]; stacked: dict of layer-stacked params."""
    L, B, H = x_lbh.shape
    NL, HG = stacked["wqkv"].shape[0], stacked["wqkv"].shape[1]
    gd = stacked["wqkv"].shape[3] // 3
    nh = mixed_attn_bias.shape[2]
    hg = nh // HG                                                             # heads per group
    F = stacked["w1"].shape[-1]

    x_blh = jnp.transpose(x_lbh, (1, 0, 2))                                   # [B, L, H] f32
    addmask = (padding_mask.astype(jnp.float32) * -1e9)[:, None, :]           # [B, 1, L] f32

    kernel = make_stack_kernel(L, H, nh, hg)

    def lspec(arr):
        # Whole per-layer parameter block; index depends only on the layer axis, so the
        # block is DMA'd once per layer (unchanged block index => Pallas skips the copy).
        tail = arr.shape[1:]
        return pl.BlockSpec((None,) + tail,
                            lambda l, b, g, _n=len(tail): (l,) + (0,) * _n)

    grid_spec = pltpu.PrefetchScalarGridSpec(
        num_scalar_prefetch=0,
        grid=(NL, B, HG),                                  # layers outer, head groups inner
        in_specs=[
            # x / mask blocks are tiny vs. the per-layer weights; re-fetch per layer is cheap.
            pl.BlockSpec((None, L, H), lambda l, b, g: (b, 0, 0)),            # x (read at l==0)
            pl.BlockSpec((None, 1, L), lambda l, b, g: (b, 0, 0)),            # additive pad mask
            pl.BlockSpec((None, None, hg, L, L),
                         lambda l, b, g: (l, b, g, 0, 0)),                    # bias head-group tile
            lspec(stacked["ln1"]), lspec(stacked["wqkv"]), lspec(stacked["bqkv"]),
            lspec(stacked["wo"]), lspec(stacked["bo"]), lspec(stacked["ln2"]),
            lspec(stacked["w1"]), lspec(stacked["b1"]),
            lspec(stacked["w2"]), lspec(stacked["b2"]),
        ],
        out_specs=pl.BlockSpec((None, L, H), lambda l, b, g: (b, 0, 0)),
        scratch_shapes=[
            pltpu.VMEM((B, L, H), jnp.float32),   # residual stream for the whole batch tile
            pltpu.VMEM((L, H), jnp.bfloat16),     # LN1 output, reused across head groups
            pltpu.VMEM((L, H), jnp.float32),      # attention-output accumulator
        ],
    )
    out_blh = pl.pallas_call(
        kernel,
        out_shape=jax.ShapeDtypeStruct((B, L, H), jnp.float32),
        grid_spec=grid_spec,
        compiler_params=pltpu.CompilerParams(
            # layer axis is sequential; parallel axes must precede arbitrary ones, so all
            # three are 'arbitrary' here (see v7x TODO at the top).
            dimension_semantics=("arbitrary", "arbitrary", "arbitrary"),
            vmem_limit_bytes=_VMEM_LIMIT_BYTES),
    )(x_blh, addmask, mixed_attn_bias,
      stacked["ln1"], stacked["wqkv"], stacked["bqkv"], stacked["wo"], stacked["bo"],
      stacked["ln2"], stacked["w1"], stacked["b1"], stacked["w2"], stacked["b2"])
    return jnp.transpose(out_blh, (1, 0, 2))                                  # back to [L, B, H]


# ----------------------------------------------------------------------------
# Parameter handling: per-layer f32 dicts -> layer-stacked, head-grouped arrays
# (bf16 matmul weights, f32 LN params / biases).  The 1/sqrt(dh) attention scale
# is folded into the Q columns of wqkv and the Q part of bqkv.
# ----------------------------------------------------------------------------
def stack_params(params_list, nh, heads_per_group):
    H = params_list[0]["wo"].shape[0]
    dh = H // nh
    assert nh % heads_per_group == 0
    HG = nh // heads_per_group
    gd = heads_per_group * dh
    scale = 1.0 / float(dh) ** 0.5

    def qkv_group(W):
        # W: (R, 3H), columns = [Q | K | V], each head-major -> (HG, R, 3*gd).
        R = W.shape[0]
        Wq, Wk, Wv = W[:, :H] * scale, W[:, H:2 * H], W[:, 2 * H:]

        def grp(M):
            return M.reshape(R, HG, gd).transpose(1, 0, 2)                     # (HG, R, gd)

        return jnp.concatenate([grp(Wq), grp(Wk), grp(Wv)], axis=-1)           # (HG, R, 3gd)

    def stk(fn, name, dtype):
        return jnp.stack([fn(p[name]) for p in params_list]).astype(dtype)

    ident = lambda a: a
    return {
        "ln1": stk(ident, "ln1", jnp.float32),
        "wqkv": stk(qkv_group, "wqkv", jnp.bfloat16),          # (NL, HG, H, 3gd)
        "bqkv": stk(qkv_group, "bqkv", jnp.float32),           # (NL, HG, 1, 3gd)
        "wo": stk(lambda w: w.reshape(HG, gd, H), "wo", jnp.bfloat16),   # (NL, HG, gd, H)
        "bo": stk(ident, "bo", jnp.float32),
        "ln2": stk(ident, "ln2", jnp.float32),
        "w1": stk(ident, "w1", jnp.bfloat16),
        "b1": stk(ident, "b1", jnp.float32),
        "w2": stk(ident, "w2", jnp.bfloat16),
        "b2": stk(ident, "b2", jnp.float32),
    }


def init_params(key, num_layers, H, F):
    params = []
    for li in range(num_layers):
        ks = jax.random.split(jax.random.fold_in(key, li), 8)
        scale = 0.02
        p = {
            "ln1": jnp.concatenate([jnp.ones((1, H)), jnp.zeros((1, H))], 0).astype(jnp.float32),
            "wqkv": (scale * jax.random.normal(ks[0], (H, 3 * H))).astype(jnp.float32),
            "bqkv": (scale * jax.random.normal(ks[1], (1, 3 * H))).astype(jnp.float32),
            "wo": (scale * jax.random.normal(ks[2], (H, H))).astype(jnp.float32),
            "bo": (scale * jax.random.normal(ks[3], (1, H))).astype(jnp.float32),
            "ln2": jnp.concatenate([jnp.ones((1, H)), jnp.zeros((1, H))], 0).astype(jnp.float32),
            "w1": (scale * jax.random.normal(ks[4], (H, F))).astype(jnp.float32),
            "b1": (scale * jax.random.normal(ks[5], (1, F))).astype(jnp.float32),
            "w2": (scale * jax.random.normal(ks[6], (F, H))).astype(jnp.float32),
            "b2": (scale * jax.random.normal(ks[7], (1, H))).astype(jnp.float32),
        }
        params.append(p)
    return params


# ----------------------------------------------------------------------------
# Pure-JAX f32 reference (module semantics) for a correctness spot-check.
# ----------------------------------------------------------------------------
def _ref_layer(x, addmask, bias, p, nh):
    B, L, H = x.shape
    dh = H // nh

    def ln(v, pp):
        g, b = pp[0], pp[1]
        mu = jnp.mean(v, -1, keepdims=True)
        var = jnp.mean((v - mu) ** 2, -1, keepdims=True)
        return (v - mu) * jax.lax.rsqrt(var + 1e-5) * g + b

    h = ln(x, p["ln1"])
    qkv = h @ p["wqkv"] + p["bqkv"][0]
    q, k, v = qkv[..., :H], qkv[..., H:2 * H], qkv[..., 2 * H:]
    q = q.reshape(B, L, nh, dh).transpose(0, 2, 1, 3)
    k = k.reshape(B, L, nh, dh).transpose(0, 2, 1, 3)
    v = v.reshape(B, L, nh, dh).transpose(0, 2, 1, 3)
    s = jnp.einsum("bhqd,bhkd->bhqk", q, k) / (dh ** 0.5) + bias + addmask[:, :, None, :]
    pmat = jax.nn.softmax(s, axis=-1)
    a = jnp.einsum("bhqk,bhkd->bhqd", pmat, v).transpose(0, 2, 1, 3).reshape(B, L, H)
    x = x + (a @ p["wo"] + p["bo"][0])
    h2 = ln(x, p["ln2"])
    f = _gelu(h2 @ p["w1"] + p["b1"][0])
    return x + (f @ p["w2"] + p["b2"][0])


def ref_forward(x_lbh, padding_mask, mixed_attn_bias, params_list, nh):
    x = jnp.transpose(x_lbh, (1, 0, 2))
    addmask = (padding_mask.astype(jnp.float32) * -1e9)[:, None, :]
    for li, p in enumerate(params_list):
        x = _ref_layer(x, addmask, mixed_attn_bias[li], p, nh)
    return jnp.transpose(x, (1, 0, 2))


if __name__ == "__main__":
    # Small, module-consistent shapes (H a multiple of 128 for lane-dense stores).
    L, B, H = 16, 2, 128        # seq, batch, embedding_dim
    nh, F = 4, 256              # num_attention_heads, ffn_embedding_dim
    num_layers = 2              # num_encoder_layers
    heads_per_group = 2         # attention head-group tile (HG = nh // heads_per_group)

    key = jax.random.PRNGKey(0)
    kx, kb, kp = jax.random.split(key, 3)

    x = jax.random.normal(kx, (L, B, H), dtype=jnp.float32)                      # [L, B, H]
    padding_mask = jnp.zeros((B, L), dtype=bool).at[1, L - 3:].set(True)         # [B, L], True = pad
    mixed_attn_bias = 0.1 * jax.random.normal(kb, (num_layers, B, nh, L, L),
                                              dtype=jnp.float32)                 # per-layer bias
    params = init_params(kp, num_layers, H, F)
    stacked = stack_params(params, nh, heads_per_group)

    out = psm_encoder_forward(x, padding_mask, mixed_attn_bias, stacked)
    out = jax.block_until_ready(out)

    ref = ref_forward(x, padding_mask, mixed_attn_bias, params, nh)
    assert out.shape == (L, B, H)
    assert jnp.allclose(out, ref, atol=2e-2, rtol=2e-2), "Pallas output mismatch vs reference"

    print("KERNEL_OK")
</pallas_src>

<mosaic_0001>
module attributes {stable_mosaic.version = 11 : i64} {
  func.func @kernel(%arg0: i32, %arg1: i32, %arg2: i32, %arg3: memref<1x16x128xf32, #tpu.memory_space<vmem>>, %arg4: memref<1x1x16xf32, #tpu.memory_space<vmem>>, %arg5: memref<1x1x2x16x16xf32, #tpu.memory_space<vmem>>, %arg6: memref<1x2x128xf32, #tpu.memory_space<vmem>>, %arg7: memref<1x2x128x192xbf16, #tpu.memory_space<vmem>>, %arg8: memref<1x2x1x192xf32, #tpu.memory_space<vmem>>, %arg9: memref<1x2x64x128xbf16, #tpu.memory_space<vmem>>, %arg10: memref<1x1x128xf32, #tpu.memory_space<vmem>>, %arg11: memref<1x2x128xf32, #tpu.memory_space<vmem>>, %arg12: memref<1x128x256xbf16, #tpu.memory_space<vmem>>, %arg13: memref<1x1x256xf32, #tpu.memory_space<vmem>>, %arg14: memref<1x256x128xbf16, #tpu.memory_space<vmem>>, %arg15: memref<1x1x128xf32, #tpu.memory_space<vmem>>, %arg16: memref<1x16x128xf32, #tpu.memory_space<vmem>>, %arg17: memref<2x16x128xf32, #tpu.memory_space<vmem>>, %arg18: memref<16x128xbf16, #tpu.memory_space<vmem>>, %arg19: memref<16x128xf32, #tpu.memory_space<vmem>>) attributes {dimension_semantics = [#tpu.dimension_semantics<arbitrary>, #tpu.dimension_semantics<arbitrary>, #tpu.dimension_semantics<arbitrary>], iteration_bounds = array<i64: 2, 2, 2>, scalar_prefetch = 0 : i64, scratch_operands = 3 : i64, tpu.core_type = #tpu.core_type<tc>, window_params = [{transform_indices = @transform_0, window_bounds = array<i64: 1, 16, 128>}, {transform_indices = @transform_1, window_bounds = array<i64: 1, 1, 16>}, {transform_indices = @transform_2, window_bounds = array<i64: 1, 1, 2, 16, 16>}, {transform_indices = @transform_3, window_bounds = array<i64: 1, 2, 128>}, {transform_indices = @transform_4, window_bounds = array<i64: 1, 2, 128, 192>}, {transform_indices = @transform_5, window_bounds = array<i64: 1, 2, 1, 192>}, {transform_indices = @transform_6, window_bounds = array<i64: 1, 2, 64, 128>}, {transform_indices = @transform_7, window_bounds = array<i64: 1, 1, 128>}, {transform_indices = @transform_8, window_bounds = array<i64: 1, 2, 128>}, {transform_indices = @transform_9, window_bounds = array<i64: 1, 128, 256>}, {transform_indices = @transform_10, window_bounds = array<i64: 1, 1, 256>}, {transform_indices = @transform_11, window_bounds = array<i64: 1, 256, 128>}, {transform_indices = @transform_12, window_bounds = array<i64: 1, 1, 128>}, {transform_indices = @transform_13, window_bounds = array<i64: 1, 16, 128>}]} {
    %c0_i32 = arith.constant 0 : i32
    %0 = arith.cmpi eq, %arg0, %c0_i32 : i32
    %c0_i32_0 = arith.constant 0 : i32
    %1 = arith.cmpi eq, %arg2, %c0_i32_0 : i32
    %2 = arith.andi %0, %1 : i1
    %3 = arith.extui %2 : i1 to i32
    %c0_i32_1 = arith.constant 0 : i32
    %4 = arith.cmpi ne, %3, %c0_i32_1 : i32
    scf.if %4 {
      %c0_32 = arith.constant 0 : index
      %c0_33 = arith.constant 0 : index
      %c0_34 = arith.constant 0 : index
      %63 = vector.load %arg3[%c0_32, %c0_33, %c0_34] : memref<1x16x128xf32, #tpu.memory_space<vmem>>, vector<1x16x128xf32>
      %64 = vector.shape_cast %63 : vector<1x16x128xf32> to vector<16x128xf32>
      %65 = arith.index_cast %arg1 : i32 to index
      %c0_35 = arith.constant 0 : index
      %c0_36 = arith.constant 0 : index
      %66 = vector.load %arg17[%65, %c0_35, %c0_36] : memref<2x16x128xf32, #tpu.memory_space<vmem>>, vector<1x16x128xf32>
      %67 = vector.shape_cast %66 : vector<1x16x128xf32> to vector<16x128xf32>
      %68 = vector.shape_cast %64 : vector<16x128xf32> to vector<1x16x128xf32>
      tpu.vector_store %arg17[%65, %c0_35, %c0_36], %68 {strides = array<i32>} : memref<2x16x128xf32, #tpu.memory_space<vmem>>, vector<1x16x128xf32>,
    } else {
    }
    %c0_i32_2 = arith.constant 0 : i32
    %5 = arith.cmpi eq, %arg2, %c0_i32_2 : i32
    %6 = arith.extui %5 : i1 to i32
    %c0_i32_3 = arith.constant 0 : i32
    %7 = arith.cmpi ne, %6, %c0_i32_3 : i32
    scf.if %7 {
      %63 = arith.index_cast %arg1 : i32 to index
      %c0_32 = arith.constant 0 : index
      %c0_33 = arith.constant 0 : index
      %64 = vector.load %arg17[%63, %c0_32, %c0_33] : memref<2x16x128xf32, #tpu.memory_space<vmem>>, vector<1x16x128xf32>
      %65 = vector.shape_cast %64 : vector<1x16x128xf32> to vector<16x128xf32>
      %c0_34 = arith.constant 0 : index
      %c0_35 = arith.constant 0 : index
      %c0_36 = arith.constant 0 : index
      %66 = vector.load %arg6[%c0_34, %c0_35, %c0_36] : memref<1x2x128xf32, #tpu.memory_space<vmem>>, vector<1x2x128xf32>
      %67 = vector.shape_cast %66 : vector<1x2x128xf32> to vector<2x128xf32>
      %68 = vector.extract_strided_slice %67 {offsets = [0, 0], sizes = [1, 128], strides = [1, 1]} : vector<2x128xf32> to vector<1x128xf32>
      %69 = vector.extract_strided_slice %67 {offsets = [1, 0], sizes = [1, 128], strides = [1, 1]} : vector<2x128xf32> to vector<1x128xf32>
      %cst_37 = arith.constant dense<0.000000e+00> : vector<16xf32>
      %70 = vector.multi_reduction <add>, %65, %cst_37 [1] : vector<16x128xf32> to vector<16xf32>
      %71 = vector.shape_cast %70 : vector<16xf32> to vector<16x1xf32>
      %cst_38 = arith.constant 1.280000e+02 : f32
      %72 = vector.broadcast %cst_38 : f32 to vector<16x1xf32>
      %73 = arith.divf %71, %72 : vector<16x1xf32>
      %74 = vector.broadcast %73 : vector<16x1xf32> to vector<16x128xf32>
      %75 = arith.subf %65, %74 : vector<16x128xf32>
      %76 = arith.mulf %75, %75 : vector<16x128xf32>
      %cst_39 = arith.constant dense<0.000000e+00> : vector<16xf32>
      %77 = vector.multi_reduction <add>, %76, %cst_39 [1] : vector<16x128xf32> to vector<16xf32>
      %78 = vector.shape_cast %77 : vector<16xf32> to vector<16x1xf32>
      %cst_40 = arith.constant 1.280000e+02 : f32
      %79 = vector.broadcast %cst_40 : f32 to vector<16x1xf32>
      %80 = arith.divf %78, %79 : vector<16x1xf32>
      %81 = vector.broadcast %73 : vector<16x1xf32> to vector<16x128xf32>
      %82 = arith.subf %65, %81 : vector<16x128xf32>
      %cst_41 = arith.constant 9.99999974E-6 : f32
      %83 = vector.broadcast %cst_41 : f32 to vector<16x1xf32>
      %84 = arith.addf %80, %83 : vector<16x1xf32>
      %85 = math.rsqrt %84 : vector<16x1xf32>
      %86 = vector.broadcast %85 : vector<16x1xf32> to vector<16x128xf32>
      %87 = arith.mulf %82, %86 : vector<16x128xf32>
      %88 = vector.broadcast %68 : vector<1x128xf32> to vector<16x128xf32>
      %89 = arith.mulf %87, %88 : vector<16x128xf32>
      %90 = vector.broadcast %69 : vector<1x128xf32> to vector<16x128xf32>
      %91 = arith.addf %89, %90 : vector<16x128xf32>
      %92 = arith.truncf %91 : vector<16x128xf32> to vector<16x128xbf16>
      %c0_42 = arith.constant 0 : index
      %c0_43 = arith.constant 0 : index
      %93 = vector.load %arg18[%c0_42, %c0_43] : memref<16x128xbf16, #tpu.memory_space<vmem>>, vector<16x128xbf16>
      tpu.vector_store %arg18[%c0_42, %c0_43], %92 {strides = array<i32>} : memref<16x128xbf16, #tpu.memory_space<vmem>>, vector<16x128xbf16>,
      %cst_44 = arith.constant 0.000000e+00 : f32
      %94 = vector.broadcast %cst_44 : f32 to vector<16x128xf32>
      %c0_45 = arith.constant 0 : index
      %c0_46 = arith.constant 0 : index
      %95 = vector.load %arg19[%c0_45, %c0_46] : memref<16x128xf32, #tpu.memory_space<vmem>>, vector<16x128xf32>
      tpu.vector_store %arg19[%c0_45, %c0_46], %94 {strides = array<i32>} : memref<16x128xf32, #tpu.memory_space<vmem>>, vector<16x128xf32>,
    } else {
    }
    %c0 = arith.constant 0 : index
    %c0_4 = arith.constant 0 : index
    %8 = vector.load %arg18[%c0, %c0_4] : memref<16x128xbf16, #tpu.memory_space<vmem>>, vector<16x128xbf16>
    %c0_5 = arith.constant 0 : index
    %9 = arith.index_cast %arg2 : i32 to index
    %c0_6 = arith.constant 0 : index
    %c0_7 = arith.constant 0 : index
    %10 = vector.load %arg7[%c0_5, %9, %c0_6, %c0_7] : memref<1x2x128x192xbf16, #tpu.memory_space<vmem>>, vector<1x1x128x192xbf16>
    %11 = vector.shape_cast %10 : vector<1x1x128x192xbf16> to vector<128x192xbf16>
    %cst = arith.constant dense<0.000000e+00> : vector<16x192xf32>
    %12 = tpu.matmul %8, %11, %cst {dimension_numbers = #tpu.dot_dimension_numbers<[1], [0], [0], [1], [0, 0, 1, 1], [], []>} : vector<16x128xbf16>, vector<128x192xbf16>, vector<16x192xf32> -> vector<16x192xf32>
    %c0_8 = arith.constant 0 : index
    %13 = arith.index_cast %arg2 : i32 to index
    %c0_9 = arith.constant 0 : index
    %c0_10 = arith.constant 0 : index
    %14 = vector.load %arg8[%c0_8, %13, %c0_9, %c0_10] : memref<1x2x1x192xf32, #tpu.memory_space<vmem>>, vector<1x1x1x192xf32>
    %15 = vector.shape_cast %14 : vector<1x1x1x192xf32> to vector<1x192xf32>
    %16 = vector.broadcast %15 : vector<1x192xf32> to vector<16x192xf32>
    %17 = arith.addf %12, %16 : vector<16x192xf32>
    %18 = vector.extract_strided_slice %17 {offsets = [0, 0], sizes = [16, 64], strides = [1, 1]} : vector<16x192xf32> to vector<16x64xf32>
    %19 = vector.shape_cast %18 : vector<16x64xf32> to vector<16x2x32xf32>
    %20 = tpu.transpose %19, [1, 0, 2] : vector<16x2x32xf32> -> vector<2x16x32xf32>
    %21 = vector.extract_strided_slice %17 {offsets = [0, 64], sizes = [16, 64], strides = [1, 1]} : vector<16x192xf32> to vector<16x64xf32>
    %22 = vector.shape_cast %21 : vector<16x64xf32> to vector<16x2x32xf32>
    %23 = tpu.transpose %22, [1, 0, 2] : vector<16x2x32xf32> -> vector<2x16x32xf32>
    %24 = vector.extract_strided_slice %17 {offsets = [0, 128], sizes = [16, 64], strides = [1, 1]} : vector<16x192xf32> to vector<16x64xf32>
    %25 = vector.shape_cast %24 : vector<16x64xf32> to vector<16x2x32xf32>
    %26 = tpu.transpose %25, [1, 0, 2] : vector<16x2x32xf32> -> vector<2x16x32xf32>
    %27 = arith.truncf %20 : vector<2x16x32xf32> to vector<2x16x32xbf16>
    %28 = arith.truncf %23 : vector<2x16x32xf32> to vector<2x16x32xbf16>
    "tpu.trace_start"() <{level = 10 : i32, message = "hqd,hkd->hqk"}> : () -> ()
    %cst_11 = arith.constant dense<0.000000e+00> : vector<2x16x16xf32>
    %29 = tpu.matmul %27, %28, %cst_11 {dimension_numbers = #tpu.dot_dimension_numbers<[2], [2], [1], [1], [0, 0, 0, 1, 1, 1], [0], [0]>} : vector<2x16x32xbf16>, vector<2x16x32xbf16>, vector<2x16x16xf32> -> vector<2x16x16xf32>
    "tpu.trace_stop"() : () -> ()
    %c0_12 = arith.constant 0 : index
    %c0_13 = arith.constant 0 : index
    %c0_14 = arith.constant 0 : index
    %c0_15 = arith.constant 0 : index
    %c0_16 = arith.constant 0 : index
    %30 = vector.load %arg5[%c0_12, %c0_13, %c0_14, %c0_15, %c0_16] : memref<1x1x2x16x16xf32, #tpu.memory_space<vmem>>, vector<1x1x2x16x16xf32>
    %31 = vector.shape_cast %30 : vector<1x1x2x16x16xf32> to vector<2x16x16xf32>
    %32 = arith.addf %29, %31 : vector<2x16x16xf32>
    %c0_17 = arith.constant 0 : index
    %c0_18 = arith.constant 0 : index
    %c0_19 = arith.constant 0 : index
    %33 = vector.load %arg4[%c0_17, %c0_18, %c0_19] : memref<1x1x16xf32, #tpu.memory_space<vmem>>, vector<1x1x16xf32>
    %34 = vector.shape_cast %33 : vector<1x1x16xf32> to vector<1x16xf32>
    %35 = vector.shape_cast %34 : vector<1x16xf32> to vector<1x1x16xf32>
    %36 = vector.broadcast %35 : vector<1x1x16xf32> to vector<2x16x16xf32>
    %37 = arith.addf %32, %36 : vector<2x16x16xf32>
    %cst_20 = arith.constant dense<0xFF800000> : vector<2x16xf32>
    %38 = vector.multi_reduction <maximumf>, %37, %cst_20 [2] : vector<2x16x16xf32> to vector<2x16xf32>
    %39 = vector.shape_cast %38 : vector<2x16xf32> to vector<2x16x1xf32>
    %40 = vector.broadcast %39 : vector<2x16x1xf32> to vector<2x16x16xf32>
    %41 = arith.subf %37, %40 : vector<2x16x16xf32>
    %42 = math.exp %41 : vector<2x16x16xf32>
    %cst_21 = arith.constant dense<0.000000e+00> : vector<2x16xf32>
    %43 = vector.multi_reduction <add>, %42, %cst_21 [2] : vector<2x16x16xf32> to vector<2x16xf32>
    %44 = vector.shape_cast %43 : vector<2x16xf32> to vector<2x16x1xf32>
    %45 = arith.truncf %42 : vector<2x16x16xf32> to vector<2x16x16xbf16>
    %46 = arith.truncf %26 : vector<2x16x32xf32> to vector<2x16x32xbf16>
    "tpu.trace_start"() <{level = 10 : i32, message = "hqk,hkd->hqd"}> : () -> ()
    %cst_22 = arith.constant dense<0.000000e+00> : vector<2x16x32xf32>
    %47 = tpu.matmul %45, %46, %cst_22 {dimension_numbers = #tpu.dot_dimension_numbers<[2], [1], [1], [2], [0, 0, 0, 1, 1, 2], [0], [0]>} : vector<2x16x16xbf16>, vector<2x16x32xbf16>, vector<2x16x32xf32> -> vector<2x16x32xf32>
    "tpu.trace_stop"() : () -> ()
    %48 = vector.broadcast %44 : vector<2x16x1xf32> to vector<2x16x32xf32>
    %49 = arith.divf %47, %48 : vector<2x16x32xf32>
    %50 = tpu.transpose %49, [1, 0, 2] : vector<2x16x32xf32> -> vector<16x2x32xf32>
    %51 = vector.shape_cast %50 : vector<16x2x32xf32> to vector<16x64xf32>
    %c0_23 = arith.constant 0 : index
    %c0_24 = arith.constant 0 : index
    %52 = vector.load %arg19[%c0_23, %c0_24] : memref<16x128xf32, #tpu.memory_space<vmem>>, vector<16x128xf32>
    %53 = arith.truncf %51 : vector<16x64xf32> to vector<16x64xbf16>
    %c0_25 = arith.constant 0 : index
    %54 = arith.index_cast %arg2 : i32 to index
    %c0_26 = arith.constant 0 : index
    %c0_27 = arith.constant 0 : index
    %55 = vector.load %arg9[%c0_25, %54, %c0_26, %c0_27] : memref<1x2x64x128xbf16, #tpu.memory_space<vmem>>, vector<1x1x64x128xbf16>
    %56 = vector.shape_cast %55 : vector<1x1x64x128xbf16> to vector<64x128xbf16>
    %cst_28 = arith.constant dense<0.000000e+00> : vector<16x128xf32>
    %57 = tpu.matmul %53, %56, %cst_28 {dimension_numbers = #tpu.dot_dimension_numbers<[1], [0], [0], [1], [0, 0, 1, 1], [], []>} : vector<16x64xbf16>, vector<64x128xbf16>, vector<16x128xf32> -> vector<16x128xf32>
    %58 = arith.addf %52, %57 : vector<16x128xf32>
    %c0_29 = arith.constant 0 : index
    %c0_30 = arith.constant 0 : index
    %59 = vector.load %arg19[%c0_29, %c0_30] : memref<16x128xf32, #tpu.memory_space<vmem>>, vector<16x128xf32>
    tpu.vector_store %arg19[%c0_29, %c0_30], %58 {strides = array<i32>} : memref<16x128xf32, #tpu.memory_space<vmem>>, vector<16x128xf32>,
    %c1_i32 = arith.constant 1 : i32
    %60 = arith.cmpi eq, %arg2, %c1_i32 : i32
    %61 = arith.extui %60 : i1 to i32
    %c0_i32_31 = arith.constant 0 : i32
    %62 = arith.cmpi ne, %61, %c0_i32_31 : i32
    scf.if %62 {
      %63 = arith.index_cast %arg1 : i32 to index
      %c0_32 = arith.constant 0 : index
      %c0_33 = arith.constant 0 : index
      %64 = vector.load %arg17[%63, %c0_32, %c0_33] : memref<2x16x128xf32, #tpu.memory_space<vmem>>, vector<1x16x128xf32>
      %65 = vector.shape_cast %64 : vector<1x16x128xf32> to vector<16x128xf32>
      %c0_34 = arith.constant 0 : index
      %c0_35 = arith.constant 0 : index
      %66 = vector.load %arg19[%c0_34, %c0_35] : memref<16x128xf32, #tpu.memory_space<vmem>>, vector<16x128xf32>
      %67 = arith.addf %65, %66 : vector<16x128xf32>
      %c0_36 = arith.constant 0 : index
      %c0_37 = arith.constant 0 : index
      %c0_38 = arith.constant 0 : index
      %68 = vector.load %arg10[%c0_36, %c0_37, %c0_38] : memref<1x1x128xf32, #tpu.memory_space<vmem>>, vector<1x1x128xf32>
      %69 = vector.shape_cast %68 : vector<1x1x128xf32> to vector<1x128xf32>
      %70 = vector.broadcast %69 : vector<1x128xf32> to vector<16x128xf32>
      %71 = arith.addf %67, %70 : vector<16x128xf32>
      %c0_39 = arith.constant 0 : index
      %c0_40 = arith.constant 0 : index
      %c0_41 = arith.constant 0 : index
      %72 = vector.load %arg11[%c0_39, %c0_40, %c0_41] : memref<1x2x128xf32, #tpu.memory_space<vmem>>, vector<1x2x128xf32>
      %73 = vector.shape_cast %72 : vector<1x2x128xf32> to vector<2x128xf32>
      %74 = vector.extract_strided_slice %73 {offsets = [0, 0], sizes = [1, 128], strides = [1, 1]} : vector<2x128xf32> to vector<1x128xf32>
      %75 = vector.extract_strided_slice %73 {offsets = [1, 0], sizes = [1, 128], strides = [1, 1]} : vector<2x128xf32> to vector<1x128xf32>
      %cst_42 = arith.constant dense<0.000000e+00> : vector<16xf32>
      %76 = vector.multi_reduction <add>, %71, %cst_42 [1] : vector<16x128xf32> to vector<16xf32>
      %77 = vector.shape_cast %76 : vector<16xf32> to vector<16x1xf32>
      %cst_43 = arith.constant 1.280000e+02 : f32
      %78 = vector.broadcast %cst_43 : f32 to vector<16x1xf32>
      %79 = arith.divf %77, %78 : vector<16x1xf32>
      %80 = vector.broadcast %79 : vector<16x1xf32> to vector<16x128xf32>
      %81 = arith.subf %71, %80 : vector<16x128xf32>
      %82 = arith.mulf %81, %81 : vector<16x128xf32>
      %cst_44 = arith.constant dense<0.000000e+00> : vector<16xf32>
      %83 = vector.multi_reduction <add>, %82, %cst_44 [1] : vector<16x128xf32> to vector<16xf32>
      %84 = vector.shape_cast %83 : vector<16xf32> to vector<16x1xf32>
      %cst_45 = arith.constant 1.280000e+02 : f32
      %85 = vector.broadcast %cst_45 : f32 to vector<16x1xf32>
      %86 = arith.divf %84, %85 : vector<16x1xf32>
      %87 = vector.broadcast %79 : vector<16x1xf32> to vector<16x128xf32>
      %88 = arith.subf %71, %87 : vector<16x128xf32>
      %cst_46 = arith.constant 9.99999974E-6 : f32
      %89 = vector.broadcast %cst_46 : f32 to vector<16x1xf32>
      %90 = arith.addf %86, %89 : vector<16x1xf32>
      %91 = math.rsqrt %90 : vector<16x1xf32>
      %92 = vector.broadcast %91 : vector<16x1xf32> to vector<16x128xf32>
      %93 = arith.mulf %88, %92 : vector<16x128xf32>
      %94 = vector.broadcast %74 : vector<1x128xf32> to vector<16x128xf32>
      %95 = arith.mulf %93, %94 : vector<16x128xf32>
      %96 = vector.broadcast %75 : vector<1x128xf32> to vector<16x128xf32>
      %97 = arith.addf %95, %96 : vector<16x128xf32>
      %98 = arith.truncf %97 : vector<16x128xf32> to vector<16x128xbf16>
      %c0_47 = arith.constant 0 : index
      %c0_48 = arith.constant 0 : index
      %c0_49 = arith.constant 0 : index
      %99 = vector.load %arg12[%c0_47, %c0_48, %c0_49] : memref<1x128x256xbf16, #tpu.memory_space<vmem>>, vector<1x128x256xbf16>
      %100 = vector.shape_cast %99 : vector<1x128x256xbf16> to vector<128x256xbf16>
      %cst_50 = arith.constant dense<0.000000e+00> : vector<16x256xf32>
      %101 = tpu.matmul %98, %100, %cst_50 {dimension_numbers = #tpu.dot_dimension_numbers<[1], [0], [0], [1], [0, 0, 1, 1], [], []>} : vector<16x128xbf16>, vector<128x256xbf16>, vector<16x256xf32> -> vector<16x256xf32>
      %c0_51 = arith.constant 0 : index
      %c0_52 = arith.constant 0 : index
      %c0_53 = arith.constant 0 : index
      %102 = vector.load %arg13[%c0_51, %c0_52, %c0_53] : memref<1x1x256xf32, #tpu.memory_space<vmem>>, vector<1x1x256xf32>
      %103 = vector.shape_cast %102 : vector<1x1x256xf32> to vector<1x256xf32>
      %104 = vector.broadcast %103 : vector<1x256xf32> to vector<16x256xf32>
      %105 = arith.addf %101, %104 : vector<16x256xf32>
      %cst_54 = arith.constant 5.000000e-01 : f32
      %106 = vector.broadcast %cst_54 : f32 to vector<16x256xf32>
      %107 = arith.mulf %106, %105 : vector<16x256xf32>
      %cst_55 = arith.constant 4.471500e-02 : f32
      %108 = vector.broadcast %cst_55 : f32 to vector<16x256xf32>
      %109 = arith.mulf %108, %105 : vector<16x256xf32>
      %110 = arith.mulf %109, %105 : vector<16x256xf32>
      %111 = arith.mulf %110, %105 : vector<16x256xf32>
      %112 = arith.addf %105, %111 : vector<16x256xf32>
      %cst_56 = arith.constant 0.797884583 : f32
      %113 = vector.broadcast %cst_56 : f32 to vector<16x256xf32>
      %114 = arith.mulf %113, %112 : vector<16x256xf32>
      %115 = math.tanh %114 : vector<16x256xf32>
      %cst_57 = arith.constant 1.000000e+00 : f32
      %116 = vector.broadcast %cst_57 : f32 to vector<16x256xf32>
      %117 = arith.addf %116, %115 : vector<16x256xf32>
      %118 = arith.mulf %107, %117 : vector<16x256xf32>
      %119 = arith.truncf %118 : vector<16x256xf32> to vector<16x256xbf16>
      %c0_58 = arith.constant 0 : index
      %c0_59 = arith.constant 0 : index
      %c0_60 = arith.constant 0 : index
      %120 = vector.load %arg14[%c0_58, %c0_59, %c0_60] : memref<1x256x128xbf16, #tpu.memory_space<vmem>>, vector<1x256x128xbf16>
      %121 = vector.shape_cast %120 : vector<1x256x128xbf16> to vector<256x128xbf16>
      %cst_61 = arith.constant dense<0.000000e+00> : vector<16x128xf32>
      %122 = tpu.matmul %119, %121, %cst_61 {dimension_numbers = #tpu.dot_dimension_numbers<[1], [0], [0], [1], [0, 0, 1, 1], [], []>} : vector<16x256xbf16>, vector<256x128xbf16>, vector<16x128xf32> -> vector<16x128xf32>
      %123 = arith.addf %71, %122 : vector<16x128xf32>
      %c0_62 = arith.constant 0 : index
      %c0_63 = arith.constant 0 : index
      %c0_64 = arith.constant 0 : index
      %124 = vector.load %arg15[%c0_62, %c0_63, %c0_64] : memref<1x1x128xf32, #tpu.memory_space<vmem>>, vector<1x1x128xf32>
      %125 = vector.shape_cast %124 : vector<1x1x128xf32> to vector<1x128xf32>
      %126 = vector.broadcast %125 : vector<1x128xf32> to vector<16x128xf32>
      %127 = arith.addf %123, %126 : vector<16x128xf32>
      %128 = arith.index_cast %arg1 : i32 to index
      %c0_65 = arith.constant 0 : index
      %c0_66 = arith.constant 0 : index
      %129 = vector.load %arg17[%128, %c0_65, %c0_66] : memref<2x16x128xf32, #tpu.memory_space<vmem>>, vector<1x16x128xf32>
      %130 = vector.shape_cast %129 : vector<1x16x128xf32> to vector<16x128xf32>
      %131 = vector.shape_cast %127 : vector<16x128xf32> to vector<1x16x128xf32>
      tpu.vector_store %arg17[%128, %c0_65, %c0_66], %131 {strides = array<i32>} : memref<2x16x128xf32, #tpu.memory_space<vmem>>, vector<1x16x128xf32>,
      %c0_67 = arith.constant 0 : index
      %c0_68 = arith.constant 0 : index
      %c0_69 = arith.constant 0 : index
      %132 = vector.load %arg16[%c0_67, %c0_68, %c0_69] : memref<1x16x128xf32, #tpu.memory_space<vmem>>, vector<1x16x128xf32>
      %133 = vector.shape_cast %132 : vector<1x16x128xf32> to vector<16x128xf32>
      %134 = vector.shape_cast %127 : vector<16x128xf32> to vector<1x16x128xf32>
      tpu.vector_store %arg16[%c0_67, %c0_68, %c0_69], %134 {strides = array<i32>} : memref<1x16x128xf32, #tpu.memory_space<vmem>>, vector<1x16x128xf32>,
    } else {
    }
    return
  }
  func.func @transform_0(%arg0: i32, %arg1: i32, %arg2: i32) -> (i32, i32, i32) {
    %c0_i32 = arith.constant 0 : i32
    %c0_i32_0 = arith.constant 0 : i32
    %c0_i32_1 = arith.constant 0 : i32
    return %arg1, %c0_i32, %c0_i32_0 : i32, i32, i32
  }
  func.func @transform_1(%arg0: i32, %arg1: i32, %arg2: i32) -> (i32, i32, i32) {
    %c0_i32 = arith.constant 0 : i32
    %c0_i32_0 = arith.constant 0 : i32
    %c0_i32_1 = arith.constant 0 : i32
    return %arg1, %c0_i32, %c0_i32_0 : i32, i32, i32
  }
  func.func @transform_2(%arg0: i32, %arg1: i32, %arg2: i32) -> (i32, i32, i32, i32, i32) {
    %c0_i32 = arith.constant 0 : i32
    %c0_i32_0 = arith.constant 0 : i32
    %c0_i32_1 = arith.constant 0 : i32
    return %arg0, %arg1, %arg2, %c0_i32, %c0_i32_0 : i32, i32, i32, i32, i32
  }
  func.func @transform_3(%arg0: i32, %arg1: i32, %arg2: i32) -> (i32, i32, i32) {
    %c0_i32 = arith.constant 0 : i32
    %c0_i32_0 = arith.constant 0 : i32
    %c0_i32_1 = arith.constant 0 : i32
    return %arg0, %c0_i32, %c0_i32_0 : i32, i32, i32
  }
  func.func @transform_4(%arg0: i32, %arg1: i32, %arg2: i32) -> (i32, i32, i32, i32) {
    %c0_i32 = arith.constant 0 : i32
    %c0_i32_0 = arith.constant 0 : i32
    %c0_i32_1 = arith.constant 0 : i32
    %c0_i32_2 = arith.constant 0 : i32
    return %arg0, %c0_i32, %c0_i32_0, %c0_i32_1 : i32, i32, i32, i32
  }
  func.func @transform_5(%arg0: i32, %arg1: i32, %arg2: i32) -> (i32, i32, i32, i32) {
    %c0_i32 = arith.constant 0 : i32
    %c0_i32_0 = arith.constant 0 : i32
    %c0_i32_1 = arith.constant 0 : i32
    %c0_i32_2 = arith.constant 0 : i32
    return %arg0, %c0_i32, %c0_i32_0, %c0_i32_1 : i32, i32, i32, i32
  }
  func.func @transform_6(%arg0: i32, %arg1: i32, %arg2: i32) -> (i32, i32, i32, i32) {
    %c0_i32 = arith.constant 0 : i32
    %c0_i32_0 = arith.constant 0 : i32
    %c0_i32_1 = arith.constant 0 : i32
    %c0_i32_2 = arith.constant 0 : i32
    return %arg0, %c0_i32, %c0_i32_0, %c0_i32_1 : i32, i32, i32, i32
  }
  func.func @transform_7(%arg0: i32, %arg1: i32, %arg2: i32) -> (i32, i32, i32) {
    %c0_i32 = arith.constant 0 : i32
    %c0_i32_0 = arith.constant 0 : i32
    %c0_i32_1 = arith.constant 0 : i32
    return %arg0, %c0_i32, %c0_i32_0 : i32, i32, i32
  }
  func.func @transform_8(%arg0: i32, %arg1: i32, %arg2: i32) -> (i32, i32, i32) {
    %c0_i32 = arith.constant 0 : i32
    %c0_i32_0 = arith.constant 0 : i32
    %c0_i32_1 = arith.constant 0 : i32
    return %arg0, %c0_i32, %c0_i32_0 : i32, i32, i32
  }
  func.func @transform_9(%arg0: i32, %arg1: i32, %arg2: i32) -> (i32, i32, i32) {
    %c0_i32 = arith.constant 0 : i32
    %c0_i32_0 = arith.constant 0 : i32
    %c0_i32_1 = arith.constant 0 : i32
    return %arg0, %c0_i32, %c0_i32_0 : i32, i32, i32
  }
  func.func @transform_10(%arg0: i32, %arg1: i32, %arg2: i32) -> (i32, i32, i32) {
    %c0_i32 = arith.constant 0 : i32
    %c0_i32_0 = arith.constant 0 : i32
    %c0_i32_1 = arith.constant 0 : i32
    return %arg0, %c0_i32, %c0_i32_0 : i32, i32, i32
  }
  func.func @transform_11(%arg0: i32, %arg1: i32, %arg2: i32) -> (i32, i32, i32) {
    %c0_i32 = arith.constant 0 : i32
    %c0_i32_0 = arith.constant 0 : i32
    %c0_i32_1 = arith.constant 0 : i32
    return %arg0, %c0_i32, %c0_i32_0 : i32, i32, i32
  }
  func.func @transform_12(%arg0: i32, %arg1: i32, %arg2: i32) -> (i32, i32, i32) {
    %c0_i32 = arith.constant 0 : i32
    %c0_i32_0 = arith.constant 0 : i32
    %c0_i32_1 = arith.constant 0 : i32
    return %arg0, %c0_i32, %c0_i32_0 : i32, i32, i32
  }
  func.func @transform_13(%arg0: i32, %arg1: i32, %arg2: i32) -> (i32, i32, i32) {
    %c0_i32 = arith.constant 0 : i32
    %c0_i32_0 = arith.constant 0 : i32
    %c0_i32_1 = arith.constant 0 : i32
    return %arg1, %c0_i32, %c0_i32_0 : i32, i32, i32
  }
}

</mosaic_0001>

<llo_original>
// kernel: psm_encoder_forward.1
$region0: #{psm_encoder_forward.1}
  #allocation0 [shape = 'u32[]', space=smem, size = 0x4, offset = 0x4, fixed_abs, tag = 'smem constant byte address 0x4 - core index']
  #allocation1 [shape = 'u32[72,128]{1,0:T(1,128)}', space=vmem, size = 0x9000, scoped, tag = 'internal scratch']
  #allocation2 [shape = 'f32[2,16,128]{2,1,0:T(8,128)}', space=vmem, size = 0x4000, scoped, tag = 'scratch operand']
  #allocation3 [shape = 'bf16[16,128]{1,0:T(8,128)(2,1)}', space=vmem, size = 0x1000, scoped, tag = 'scratch operand']
  #allocation4 [shape = 'f32[16,128]{1,0:T(8,128)}', space=vmem, size = 0x2000, scoped, tag = 'scratch operand']
  %s0 = inlined_call_operand.vmem [shape: f32[2,16,128], index: 0, kind: input, shape index: {}]
  %s1 = inlined_call_operand.vmem [shape: f32[2,1,16], index: 1, kind: input, shape index: {}]
  %s2 = inlined_call_operand.vmem [shape: f32[2,2,4,16,16], index: 2, kind: input, shape index: {}]
  %s3 = inlined_call_operand.vmem [shape: f32[2,2,128], index: 3, kind: input, shape index: {}]
  %s4 = inlined_call_operand.vmem [shape: bf16[2,2,128,192], index: 4, kind: input, shape index: {}]
  %s5 = inlined_call_operand.vmem [shape: f32[2,2,1,192], index: 5, kind: input, shape index: {}]
  %s6 = inlined_call_operand.vmem [shape: bf16[2,2,64,128], index: 6, kind: input, shape index: {}]
  %s7 = inlined_call_operand.vmem [shape: f32[2,1,128], index: 7, kind: input, shape index: {}]
  %s8 = inlined_call_operand.vmem [shape: f32[2,2,128], index: 8, kind: input, shape index: {}]
  %s9 = inlined_call_operand.vmem [shape: bf16[2,128,256], index: 9, kind: input, shape index: {}]
  %s10 = inlined_call_operand.vmem [shape: f32[2,1,256], index: 10, kind: input, shape index: {}]
  %s11 = inlined_call_operand.vmem [shape: bf16[2,256,128], index: 11, kind: input, shape index: {}]
  %s12 = inlined_call_operand.vmem [shape: f32[2,1,128], index: 12, kind: input, shape index: {}]
  %s13 = inlined_call_operand.vmem [shape: f32[2,16,128], index: 13, kind: output, shape index: {}]
  %s14 = sld [smem:[#allocation0]]
  $region97: #{psm_encoder_forward.1} parent=0
    _
  %s16 = ssub.s32 1, %s14
  %s17 = scalar_select 0, %s16, %s14
  loop: start=0, step=1, limit=10
  $region2: #{psm_encoder_forward.1} parent=0 // loop_pre_header
    _
  $region3: #{psm_encoder_forward.1} parent=0 // loop_header
    %s19 = sphi 0, %s23
    %p20 = scmp.ge.s32.totalorder %s19, 10
    %s26 = sphi 0, %s45
    %s27 = sphi 0, %s41
    %s28 = sphi 0, %s37
    %s29 = sphi 0, %s26
    %s30 = sphi 0, %s27
    %s31 = sphi 0, %s28
    %s32 = sphi 0, %s29
    %s33 = sphi 0, %s30
    %s34 = sphi 0, %s31
    %s48 = sphi 0, %s50
    %s51 = sphi 0, %s48
    %s52 = sphi 0, %s51
    %s68 = sphi 0, %s52
    %s74 = sphi 0, %s76
    %s77 = sphi 0, %s74
    %s78 = sphi 0, %s77
    %s94 = sphi 0, %s78
    %s104 = sphi 0, %s106
    %s107 = sphi 0, %s104
    %s108 = sphi 0, %s107
    %s124 = sphi 0, %s108
    %s130 = sphi 0, %s132
    %s133 = sphi 0, %s130
    %s134 = sphi 0, %s133
    %s150 = sphi 0, %s134
    %s156 = sphi 0, %s158
    %s159 = sphi 0, %s156
    %s160 = sphi 0, %s159
    %s176 = sphi 0, %s160
    %s182 = sphi 0, %s184
    %s185 = sphi 0, %s182
    %s186 = sphi 0, %s185
    %s202 = sphi 0, %s186
    %s208 = sphi 0, %s210
    %s211 = sphi 0, %s208
    %s212 = sphi 0, %s211
    %s228 = sphi 0, %s212
    %s234 = sphi 0, %s236
    %s237 = sphi 0, %s234
    %s238 = sphi 0, %s237
    %s254 = sphi 0, %s238
    %s260 = sphi 0, %s262
    %s263 = sphi 0, %s260
    %s264 = sphi 0, %s263
    %s280 = sphi 0, %s264
    %s286 = sphi 0, %s288
    %s289 = sphi 0, %s286
    %s290 = sphi 0, %s289
    %s306 = sphi 0, %s290
    %s312 = sphi 0, %s314
    %s315 = sphi 0, %s312
    %s316 = sphi 0, %s315
    %s332 = sphi 0, %s316
    %s338 = sphi 0, %s340
    %s341 = sphi 0, %s338
    %s342 = sphi 0, %s341
    %s358 = sphi 0, %s342
    %s364 = sphi 0, %s366
    %s367 = sphi 0, %s364
    %s368 = sphi 0, %s367
    %s384 = sphi 0, %s368
    %s390 = sphi 0, %s392
    %s393 = sphi 0, %s390
    %s394 = sphi 0, %s393
    %s410 = sphi 0, %s394
  $region4: #{psm_encoder_forward.1} parent=0 // loop_header_branch
    %22 = sbr.rel (%p20) target = $region8
  $region5: #{psm_encoder_forward.1} parent=0 // loop_body
    %s24 = ssub.s32 %s19, 1
    %s25 = ssub.s32 %s19, 2
    %s35 = sadd.s32 1, %s28
    %p36 = scmp.ge.s32.totalorder %s35, 2
    %s37 = scalar_select %p36, 0, %s35
    %s38 = sadd.s32 1, %s27
    %s39 = scalar_select %p36, %s38, %s27
    %p40 = scmp.ge.s32.totalorder %s39, 2
    %s41 = scalar_select %p40, 0, %s39
    %s42 = sadd.s32 1, %s26
    %s43 = scalar_select %p40, %s42, %s26
    %p44 = scmp.ge.s32.totalorder %s43, 2
    %s45 = scalar_select %p44, 0, %s43
    %s46 = ssub.s32 %s27, %s41
    %p47 = scmp.eq.s32.totalorder %s46, 0
    %s49 = sadd.s32 %s48, 1
    %s50 = scalar_select %p47, %s48, %s49
    %p53 = pneg %p47
    %p54 = scmp.eq.s32.totalorder %s19, 7
    %p55 = por %p53, %p54
    %p56 = scmp.ne.s32.totalorder %s48, %s51
    %p57 = scmp.eq.s32.totalorder %s19, 0
    %p58 = por %p56, %p57
    %p59 = scmp.ne.s32.totalorder %s48, %s51
    %p60 = scmp.eq.s32.totalorder %s24, 7
    %p61 = por %p59, %p60
    %p62 = scmp.ne.s32.totalorder %s51, %s52
    %p63 = scmp.eq.s32.totalorder %s24, 0
    %p64 = por %p62, %p63
    %p65 = scmp.ne.s32.totalorder %s51, %s52
    %p66 = scmp.eq.s32.totalorder %s25, 7
    %p67 = por %p65, %p66
    %p69 = scmp.ne.s32.totalorder %s52, %s68
    %p70 = scmp.eq.s32.totalorder %s25, 0
    %p71 = por %p69, %p70
    %s72 = ssub.s32 %s27, %s41
    %p73 = scmp.eq.s32.totalorder %s72, 0
    %s75 = sadd.s32 %s74, 1
    %s76 = scalar_select %p73, %s74, %s75
    %p79 = pneg %p73
    %p80 = scmp.eq.s32.totalorder %s19, 7
    %p81 = por %p79, %p80
    %p82 = scmp.ne.s32.totalorder %s74, %s77
    %p83 = scmp.eq.s32.totalorder %s19, 0
    %p84 = por %p82, %p83
    %p85 = scmp.ne.s32.totalorder %s74, %s77
    %p86 = scmp.eq.s32.totalorder %s24, 7
    %p87 = por %p85, %p86
    %p88 = scmp.ne.s32.totalorder %s77, %s78
    %p89 = scmp.eq.s32.totalorder %s24, 0
    %p90 = por %p88, %p89
    %p91 = scmp.ne.s32.totalorder %s77, %s78
    %p92 = scmp.eq.s32.totalorder %s25, 7
    %p93 = por %p91, %p92
    %p95 = scmp.ne.s32.totalorder %s78, %s94
    %p96 = scmp.eq.s32.totalorder %s25, 0
    %p97 = por %p95, %p96
    %s98 = ssub.s32 %s26, %s45
    %s99 = ssub.s32 %s27, %s41
    %s100 = sor.u32 %s98, %s99
    %s101 = ssub.s32 %s28, %s37
    %s102 = sor.u32 %s100, %s101
    %p103 = scmp.eq.s32.totalorder %s102, 0
    %s105 = sadd.s32 %s104, 1
    %s106 = scalar_select %p103, %s104, %s105
    %p109 = pneg %p103
    %p110 = scmp.eq.s32.totalorder %s19, 7
    %p111 = por %p109, %p110
    %p112 = scmp.ne.s32.totalorder %s104, %s107
    %p113 = scmp.eq.s32.totalorder %s19, 0
    %p114 = por %p112, %p113
    %p115 = scmp.ne.s32.totalorder %s104, %s107
    %p116 = scmp.eq.s32.totalorder %s24, 7
    %p117 = por %p115, %p116
    %p118 = scmp.ne.s32.totalorder %s107, %s108
    %p119 = scmp.eq.s32.totalorder %s24, 0
    %p120 = por %p118, %p119
    %p121 = scmp.ne.s32.totalorder %s107, %s108
    %p122 = scmp.eq.s32.totalorder %s25, 7
    %p123 = por %p121, %p122
    %p125 = scmp.ne.s32.totalorder %s108, %s124
    %p126 = scmp.eq.s32.totalorder %s25, 0
    %p127 = por %p125, %p126
    %s128 = ssub.s32 %s26, %s45
    %p129 = scmp.eq.s32.totalorder %s128, 0
    %s131 = sadd.s32 %s130, 1
    %s132 = scalar_select %p129, %s130, %s131
    %p135 = pneg %p129
    %p136 = scmp.eq.s32.totalorder %s19, 7
    %p137 = por %p135, %p136
    %p138 = scmp.ne.s32.totalorder %s130, %s133
    %p139 = scmp.eq.s32.totalorder %s19, 0
    %p140 = por %p138, %p139
    %p141 = scmp.ne.s32.totalorder %s130, %s133
    %p142 = scmp.eq.s32.totalorder %s24, 7
    %p143 = por %p141, %p142
    %p144 = scmp.ne.s32.totalorder %s133, %s134
    %p145 = scmp.eq.s32.totalorder %s24, 0
    %p146 = por %p144, %p145
    %p147 = scmp.ne.s32.totalorder %s133, %s134
    %p148 = scmp.eq.s32.totalorder %s25, 7
    %p149 = por %p147, %p148
    %p151 = scmp.ne.s32.totalorder %s134, %s150
    %p152 = scmp.eq.s32.totalorder %s25, 0
    %p153 = por %p151, %p152
    %s154 = ssub.s32 %s26, %s45
    %p155 = scmp.eq.s32.totalorder %s154, 0
    %s157 = sadd.s32 %s156, 1
    %s158 = scalar_select %p155, %s156, %s157
    %p161 = pneg %p155
    %p162 = scmp.eq.s32.totalorder %s19, 7
    %p163 = por %p161, %p162
    %p164 = scmp.ne.s32.totalorder %s156, %s159
    %p165 = scmp.eq.s32.totalorder %s19, 0
    %p166 = por %p164, %p165
    %p167 = scmp.ne.s32.totalorder %s156, %s159
    %p168 = scmp.eq.s32.totalorder %s24, 7
    %p169 = por %p167, %p168
    %p170 = scmp.ne.s32.totalorder %s159, %s160
    %p171 = scmp.eq.s32.totalorder %s24, 0
    %p172 = por %p170, %p171
    %p173 = scmp.ne.s32.totalorder %s159, %s160
    %p174 = scmp.eq.s32.totalorder %s25, 7
    %p175 = por %p173, %p174
    %p177 = scmp.ne.s32.totalorder %s160, %s176
    %p178 = scmp.eq.s32.totalorder %s25, 0
    %p179 = por %p177, %p178
    %s180 = ssub.s32 %s26, %s45
    %p181 = scmp.eq.s32.totalorder %s180, 0
    %s183 = sadd.s32 %s182, 1
    %s184 = scalar_select %p181, %s182, %s183
    %p187 = pneg %p181
    %p188 = scmp.eq.s32.totalorder %s19, 7
    %p189 = por %p187, %p188
    %p190 = scmp.ne.s32.totalorder %s182, %s185
    %p191 = scmp.eq.s32.totalorder %s19, 0
    %p192 = por %p190, %p191
    %p193 = scmp.ne.s32.totalorder %s182, %s185
    %p194 = scmp.eq.s32.totalorder %s24, 7
    %p195 = por %p193, %p194
    %p196 = scmp.ne.s32.totalorder %s185, %s186
    %p197 = scmp.eq.s32.totalorder %s24, 0
    %p198 = por %p196, %p197
    %p199 = scmp.ne.s32.totalorder %s185, %s186
    %p200 = scmp.eq.s32.totalorder %s25, 7
    %p201 = por %p199, %p200
    %p203 = scmp.ne.s32.totalorder %s186, %s202
    %p204 = scmp.eq.s32.totalorder %s25, 0
    %p205 = por %p203, %p204
    %s206 = ssub.s32 %s26, %s45
    %p207 = scmp.eq.s32.totalorder %s206, 0
    %s209 = sadd.s32 %s208, 1
    %s210 = scalar_select %p207, %s208, %s209
    %p213 = pneg %p207
    %p214 = scmp.eq.s32.totalorder %s19, 7
    %p215 = por %p213, %p214
    %p216 = scmp.ne.s32.totalorder %s208, %s211
    %p217 = scmp.eq.s32.totalorder %s19, 0
    %p218 = por %p216, %p217
    %p219 = scmp.ne.s32.totalorder %s208, %s211
    %p220 = scmp.eq.s32.totalorder %s24, 7
    %p221 = por %p219, %p220
    %p222 = scmp.ne.s32.totalorder %s211, %s212
    %p223 = scmp.eq.s32.totalorder %s24, 0
    %p224 = por %p222, %p223
    %p225 = scmp.ne.s32.totalorder %s211, %s212
    %p226 = scmp.eq.s32.totalorder %s25, 7
    %p227 = por %p225, %p226
    %p229 = scmp.ne.s32.totalorder %s212, %s228
    %p230 = scmp.eq.s32.totalorder %s25, 0
    %p231 = por %p229, %p230
    %s232 = ssub.s32 %s26, %s45
    %p233 = scmp.eq.s32.totalorder %s232, 0
    %s235 = sadd.s32 %s234, 1
    %s236 = scalar_select %p233, %s234, %s235
    %p239 = pneg %p233
    %p240 = scmp.eq.s32.totalorder %s19, 7
    %p241 = por %p239, %p240
    %p242 = scmp.ne.s32.totalorder %s234, %s237
    %p243 = scmp.eq.s32.totalorder %s19, 0
    %p244 = por %p242, %p243
    %p245 = scmp.ne.s32.totalorder %s234, %s237
    %p246 = scmp.eq.s32.totalorder %s24, 7
    %p247 = por %p245, %p246
    %p248 = scmp.ne.s32.totalorder %s237, %s238
    %p249 = scmp.eq.s32.totalorder %s24, 0
    %p250 = por %p248, %p249
    %p251 = scmp.ne.s32.totalorder %s237, %s238
    %p252 = scmp.eq.s32.totalorder %s25, 7
    %p253 = por %p251, %p252
    %p255 = scmp.ne.s32.totalorder %s238, %s254
    %p256 = scmp.eq.s32.totalorder %s25, 0
    %p257 = por %p255, %p256
    %s258 = ssub.s32 %s26, %s45
    %p259 = scmp.eq.s32.totalorder %s258, 0
    %s261 = sadd.s32 %s260, 1
    %s262 = scalar_select %p259, %s260, %s261
    %p265 = pneg %p259
    %p266 = scmp.eq.s32.totalorder %s19, 7
    %p267 = por %p265, %p266
    %p268 = scmp.ne.s32.totalorder %s260, %s263
    %p269 = scmp.eq.s32.totalorder %s19, 0
    %p270 = por %p268, %p269
    %p271 = scmp.ne.s32.totalorder %s260, %s263
    %p272 = scmp.eq.s32.totalorder %s24, 7
    %p273 = por %p271, %p272
    %p274 = scmp.ne.s32.totalorder %s263, %s264
    %p275 = scmp.eq.s32.totalorder %s24, 0
    %p276 = por %p274, %p275
    %p277 = scmp.ne.s32.totalorder %s263, %s264
    %p278 = scmp.eq.s32.totalorder %s25, 7
    %p279 = por %p277, %p278
    %p281 = scmp.ne.s32.totalorder %s264, %s280
    %p282 = scmp.eq.s32.totalorder %s25, 0
    %p283 = por %p281, %p282
    %s284 = ssub.s32 %s26, %s45
    %p285 = scmp.eq.s32.totalorder %s284, 0
    %s287 = sadd.s32 %s286, 1
    %s288 = scalar_select %p285, %s286, %s287
    %p291 = pneg %p285
    %p292 = scmp.eq.s32.totalorder %s19, 7
    %p293 = por %p291, %p292
    %p294 = scmp.ne.s32.totalorder %s286, %s289
    %p295 = scmp.eq.s32.totalorder %s19, 0
    %p296 = por %p294, %p295
    %p297 = scmp.ne.s32.totalorder %s286, %s289
    %p298 = scmp.eq.s32.totalorder %s24, 7
    %p299 = por %p297, %p298
    %p300 = scmp.ne.s32.totalorder %s289, %s290
    %p301 = scmp.eq.s32.totalorder %s24, 0
    %p302 = por %p300, %p301
    %p303 = scmp.ne.s32.totalorder %s289, %s290
    %p304 = scmp.eq.s32.totalorder %s25, 7
    %p305 = por %p303, %p304
    %p307 = scmp.ne.s32.totalorder %s290, %s306
    %p308 = scmp.eq.s32.totalorder %s25, 0
    %p309 = por %p307, %p308
    %s310 = ssub.s32 %s26, %s45
    %p311 = scmp.eq.s32.totalorder %s310, 0
    %s313 = sadd.s32 %s312, 1
    %s314 = scalar_select %p311, %s312, %s313
    %p317 = pneg %p311
    %p318 = scmp.eq.s32.totalorder %s19, 7
    %p319 = por %p317, %p318
    %p320 = scmp.ne.s32.totalorder %s312, %s315
    %p321 = scmp.eq.s32.totalorder %s19, 0
    %p322 = por %p320, %p321
    %p323 = scmp.ne.s32.totalorder %s312, %s315
    %p324 = scmp.eq.s32.totalorder %s24, 7
    %p325 = por %p323, %p324
    %p326 = scmp.ne.s32.totalorder %s315, %s316
    %p327 = scmp.eq.s32.totalorder %s24, 0
    %p328 = por %p326, %p327
    %p329 = scmp.ne.s32.totalorder %s315, %s316
    %p330 = scmp.eq.s32.totalorder %s25, 7
    %p331 = por %p329, %p330
    %p333 = scmp.ne.s32.totalorder %s316, %s332
    %p334 = scmp.eq.s32.totalorder %s25, 0
    %p335 = por %p333, %p334
    %s336 = ssub.s32 %s26, %s45
    %p337 = scmp.eq.s32.totalorder %s336, 0
    %s339 = sadd.s32 %s338, 1
    %s340 = scalar_select %p337, %s338, %s339
    %p343 = pneg %p337
    %p344 = scmp.eq.s32.totalorder %s19, 7
    %p345 = por %p343, %p344
    %p346 = scmp.ne.s32.totalorder %s338, %s341
    %p347 = scmp.eq.s32.totalorder %s19, 0
    %p348 = por %p346, %p347
    %p349 = scmp.ne.s32.totalorder %s338, %s341
    %p350 = scmp.eq.s32.totalorder %s24, 7
    %p351 = por %p349, %p350
    %p352 = scmp.ne.s32.totalorder %s341, %s342
    %p353 = scmp.eq.s32.totalorder %s24, 0
    %p354 = por %p352, %p353
    %p355 = scmp.ne.s32.totalorder %s341, %s342
    %p356 = scmp.eq.s32.totalorder %s25, 7
    %p357 = por %p355, %p356
    %p359 = scmp.ne.s32.totalorder %s342, %s358
    %p360 = scmp.eq.s32.totalorder %s25, 0
    %p361 = por %p359, %p360
    %s362 = ssub.s32 %s26, %s45
    %p363 = scmp.eq.s32.totalorder %s362, 0
    %s365 = sadd.s32 %s364, 1
    %s366 = scalar_select %p363, %s364, %s365
    %p369 = pneg %p363
    %p370 = scmp.eq.s32.totalorder %s19, 7
    %p371 = por %p369, %p370
    %p372 = scmp.ne.s32.totalorder %s364, %s367
    %p373 = scmp.eq.s32.totalorder %s19, 0
    %p374 = por %p372, %p373
    %p375 = scmp.ne.s32.totalorder %s364, %s367
    %p376 = scmp.eq.s32.totalorder %s24, 7
    %p377 = por %p375, %p376
    %p378 = scmp.ne.s32.totalorder %s367, %s368
    %p379 = scmp.eq.s32.totalorder %s24, 0
    %p380 = por %p378, %p379
    %p381 = scmp.ne.s32.totalorder %s367, %s368
    %p382 = scmp.eq.s32.totalorder %s25, 7
    %p383 = por %p381, %p382
    %p385 = scmp.ne.s32.totalorder %s368, %s384
    %p386 = scmp.eq.s32.totalorder %s25, 0
    %p387 = por %p385, %p386
    %s388 = ssub.s32 %s27, %s41
    %p389 = scmp.eq.s32.totalorder %s388, 0
    %s391 = sadd.s32 %s390, 1
    %s392 = scalar_select %p389, %s390, %s391
    %p395 = pneg %p389
    %p396 = scmp.eq.s32.totalorder %s19, 7
    %p397 = por %p395, %p396
    %p398 = scmp.ne.s32.totalorder %s390, %s393
    %p399 = scmp.eq.s32.totalorder %s19, 0
    %p400 = por %p398, %p399
    %p401 = scmp.ne.s32.totalorder %s390, %s393
    %p402 = scmp.eq.s32.totalorder %s24, 7
    %p403 = por %p401, %p402
    %p404 = scmp.ne.s32.totalorder %s393, %s394
    %p405 = scmp.eq.s32.totalorder %s24, 0
    %p406 = por %p404, %p405
    %p407 = scmp.ne.s32.totalorder %s393, %s394
    %p408 = scmp.eq.s32.totalorder %s25, 7
    %p409 = por %p407, %p408
    %p411 = scmp.ne.s32.totalorder %s394, %s410
    %p412 = scmp.eq.s32.totalorder %s25, 0
    %p413 = por %p411, %p412
    %p414 = scmp.le.s32.totalorder 1, %s19
    %p415 = scmp.lt.s32.totalorder %s19, 9
    %p416 = pnand %p414, %p415
    %p417 = pneg %p416
    // Predicated region
    $region9: #{psm_encoder_forward.1} parent=5 // pred_check
      _
    $region10: #{psm_encoder_forward.1} parent=5 // pred_check_branch
      %419 = sbr.rel (%p416) target = $region12
    $region11: #{psm_encoder_forward.1} parent=5 // pred_region
      %s420 = ssub.s32 %s19, 1
    $region12: #{psm_encoder_forward.1} parent=5 // pred_fallthru
      _
    %p421 = scmp.lt.s32.totalorder %s19, 8
    // Predicated region
    $region13: #{psm_encoder_forward.1} parent=5 // pred_check
      %p422 = pneg %p421
    $region14: #{psm_encoder_forward.1} parent=5 // pred_check_branch
      %424 = sbr.rel (%p422) target = $region16
    $region15: #{psm_encoder_forward.1} parent=5 // pred_region
      // Predicated region
      $region17: #{psm_encoder_forward.1} parent=15 // pred_check
        %p425 = pneg %p58
      $region18: #{psm_encoder_forward.1} parent=15 // pred_check_branch
        %427 = sbr.rel (%p425) target = $region20
      $region19: #{psm_encoder_forward.1} parent=15 // pred_region
        %p428 = scmp.lt.s32.totalorder %s27, 1
        %s429 = scalar_select %p428, %s27, 1
        %s430 = smul.addr %s429, 2
        %s431 = smul.addr %s430, 8
        %s432 = scalar_lea.vmem %s0, %s431
      $region20: #{psm_encoder_forward.1} parent=15 // pred_fallthru
        _
      // Predicated region
      $region21: #{psm_encoder_forward.1} parent=15 // pred_check
        %p433 = pneg %p84
      $region22: #{psm_encoder_forward.1} parent=15 // pred_check_branch
        %435 = sbr.rel (%p433) target = $region24
      $region23: #{psm_encoder_forward.1} parent=15 // pred_region
        %p436 = scmp.lt.s32.totalorder %s27, 1
        %s437 = scalar_select %p436, %s27, 1
        %s438 = scalar_lea.vmem %s1, %s437
      $region24: #{psm_encoder_forward.1} parent=15 // pred_fallthru
        _
      // Predicated region
      $region25: #{psm_encoder_forward.1} parent=15 // pred_check
        %p439 = pneg %p114
      $region26: #{psm_encoder_forward.1} parent=15 // pred_check_branch
        %441 = sbr.rel (%p439) target = $region28
      $region27: #{psm_encoder_forward.1} parent=15 // pred_region
        %s442 = smul.u32 2, %s28
        %p443 = scmp.lt.s32.totalorder %s26, 1
        %s444 = scalar_select %p443, %s26, 1
        %p445 = scmp.lt.s32.totalorder %s27, 1
        %s446 = scalar_select %p445, %s27, 1
        %p447 = scmp.lt.s32.totalorder %s442, 3
        %s448 = scalar_select %p447, %s442, 3
        %s449 = smul.addr %s448, 2
        %s450 = smul.addr %s446, 8
        %s451 = sadd.s32 %s449, %s450
        %s452 = smul.addr %s444, 16
        %s453 = sadd.s32 %s451, %s452
        %s454 = smul.addr %s453, 8
        %s455 = scalar_lea.vmem %s2, %s454
        %s456 = smul.u32 2, %s28
      $region28: #{psm_encoder_forward.1} parent=15 // pred_fallthru
        _
      // Predicated region
      $region29: #{psm_encoder_forward.1} parent=15 // pred_check
        %p457 = pneg %p140
      $region30: #{psm_encoder_forward.1} parent=15 // pred_check_branch
        %459 = sbr.rel (%p457) target = $region32
      $region31: #{psm_encoder_forward.1} parent=15 // pred_region
        %p460 = scmp.lt.s32.totalorder %s26, 1
        %s461 = scalar_select %p460, %s26, 1
        %s462 = smul.addr %s461, 2
        %s463 = scalar_lea.vmem %s3, %s462
      $region32: #{psm_encoder_forward.1} parent=15 // pred_fallthru
        _
      // Predicated region
      $region33: #{psm_encoder_forward.1} parent=15 // pred_check
        %p464 = pneg %p166
      $region34: #{psm_encoder_forward.1} parent=15 // pred_check_branch
        %466 = sbr.rel (%p464) target = $region36
      $region35: #{psm_encoder_forward.1} parent=15 // pred_region
        %p467 = scmp.lt.s32.totalorder %s26, 1
        %s468 = scalar_select %p467, %s26, 1
        %s469 = smul.addr %s468, 64
        %s470 = smul.addr %s469, 4
        %s471 = scalar_lea.vmem %s4, %s470
      $region36: #{psm_encoder_forward.1} parent=15 // pred_fallthru
        _
      // Predicated region
      $region37: #{psm_encoder_forward.1} parent=15 // pred_check
        %p472 = pneg %p192
      $region38: #{psm_encoder_forward.1} parent=15 // pred_check_branch
        %474 = sbr.rel (%p472) target = $region40
      $region39: #{psm_encoder_forward.1} parent=15 // pred_region
        %p475 = scmp.lt.s32.totalorder %s26, 1
        %s476 = scalar_select %p475, %s26, 1
        %s477 = smul.addr %s476, 4
        %s478 = scalar_lea.vmem %s5, %s477
      $region40: #{psm_encoder_forward.1} parent=15 // pred_fallthru
        _
      // Predicated region
      $region41: #{psm_encoder_forward.1} parent=15 // pred_check
        %p479 = pneg %p218
      $region42: #{psm_encoder_forward.1} parent=15 // pred_check_branch
        %481 = sbr.rel (%p479) target = $region44
      $region43: #{psm_encoder_forward.1} parent=15 // pred_region
        %p482 = scmp.lt.s32.totalorder %s26, 1
        %s483 = scalar_select %p482, %s26, 1
        %s484 = smul.addr %s483, 16
        %s485 = smul.addr %s484, 4
        %s486 = scalar_lea.vmem %s6, %s485
      $region44: #{psm_encoder_forward.1} parent=15 // pred_fallthru
        _
      // Predicated region
      $region45: #{psm_encoder_forward.1} parent=15 // pred_check
        %p487 = pneg %p244
      $region46: #{psm_encoder_forward.1} parent=15 // pred_check_branch
        %489 = sbr.rel (%p487) target = $region48
      $region47: #{psm_encoder_forward.1} parent=15 // pred_region
        %p490 = scmp.lt.s32.totalorder %s26, 1
        %s491 = scalar_select %p490, %s26, 1
        %s492 = scalar_lea.vmem %s7, %s491
      $region48: #{psm_encoder_forward.1} parent=15 // pred_fallthru
        _
      // Predicated region
      $region49: #{psm_encoder_forward.1} parent=15 // pred_check
        %p493 = pneg %p270
      $region50: #{psm_encoder_forward.1} parent=15 // pred_check_branch
        %495 = sbr.rel (%p493) target = $region52
      $region51: #{psm_encoder_forward.1} parent=15 // pred_region
        %p496 = scmp.lt.s32.totalorder %s26, 1
        %s497 = scalar_select %p496, %s26, 1
        %s498 = smul.addr %s497, 2
        %s499 = scalar_lea.vmem %s8, %s498
      $region52: #{psm_encoder_forward.1} parent=15 // pred_fallthru
        _
      // Predicated region
      $region53: #{psm_encoder_forward.1} parent=15 // pred_check
        %p500 = pneg %p296
      $region54: #{psm_encoder_forward.1} parent=15 // pred_check_branch
        %502 = sbr.rel (%p500) target = $region56
      $region55: #{psm_encoder_forward.1} parent=15 // pred_region
        %p503 = scmp.lt.s32.totalorder %s26, 1
        %s504 = scalar_select %p503, %s26, 1
        %s505 = smul.addr %s504, 32
        %s506 = smul.addr %s505, 4
        %s507 = scalar_lea.vmem %s9, %s506
      $region56: #{psm_encoder_forward.1} parent=15 // pred_fallthru
        _
      // Predicated region
      $region57: #{psm_encoder_forward.1} parent=15 // pred_check
        %p508 = pneg %p322
      $region58: #{psm_encoder_forward.1} parent=15 // pred_check_branch
        %510 = sbr.rel (%p508) target = $region60
      $region59: #{psm_encoder_forward.1} parent=15 // pred_region
        %p511 = scmp.lt.s32.totalorder %s26, 1
        %s512 = scalar_select %p511, %s26, 1
        %s513 = smul.addr %s512, 2
        %s514 = scalar_lea.vmem %s10, %s513
      $region60: #{psm_encoder_forward.1} parent=15 // pred_fallthru
        _
      // Predicated region
      $region61: #{psm_encoder_forward.1} parent=15 // pred_check
        %p515 = pneg %p348
      $region62: #{psm_encoder_forward.1} parent=15 // pred_check_branch
        %517 = sbr.rel (%p515) target = $region64
      $region63: #{psm_encoder_forward.1} parent=15 // pred_region
        %p518 = scmp.lt.s32.totalorder %s26, 1
        %s519 = scalar_select %p518, %s26, 1
        %s520 = smul.addr %s519, 32
        %s521 = smul.addr %s520, 4
        %s522 = scalar_lea.vmem %s11, %s521
      $region64: #{psm_encoder_forward.1} parent=15 // pred_fallthru
        _
      // Predicated region
      $region65: #{psm_encoder_forward.1} parent=15 // pred_check
        %p523 = pneg %p374
      $region66: #{psm_encoder_forward.1} parent=15 // pred_check_branch
        %525 = sbr.rel (%p523) target = $region68
      $region67: #{psm_encoder_forward.1} parent=15 // pred_region
        %p526 = scmp.lt.s32.totalorder %s26, 1
        %s527 = scalar_select %p526, %s26, 1
        %s528 = scalar_lea.vmem %s12, %s527
      $region68: #{psm_encoder_forward.1} parent=15 // pred_fallthru
        _
    $region16: #{psm_encoder_forward.1} parent=5 // pred_fallthru
      _
    %p529 = scmp.le.s32.totalorder 1, %s19
    %p530 = scmp.lt.s32.totalorder %s19, 9
    %p531 = pnand %p529, %p530
    %p532 = pneg %p531
    // Predicated region
    $region69: #{psm_encoder_forward.1} parent=5 // pred_check
      _
    $region70: #{psm_encoder_forward.1} parent=5 // pred_check_branch
      %534 = sbr.rel (%p531) target = $region72
    $region71: #{psm_encoder_forward.1} parent=5 // pred_region
      %s535 = ssub.s32 %s19, 1
      %p536 = scmp.lt.s32.totalorder %s30, 1
      %s537 = scalar_select %p536, %s30, 1
      %s538 = smul.addr %s537, 2
      %s539 = smul.addr %s538, 8
      %s540 = scalar_lea.vmem %s0, %s539
      %p541 = pneg %p64
      %p542 = pneg %p61
      %p543 = scmp.lt.s32.totalorder %s30, 1
      %s544 = scalar_select %p543, %s30, 1
      %s545 = scalar_lea.vmem %s1, %s544
      %p546 = pneg %p90
      %p547 = pneg %p87
      %s548 = smul.u32 2, %s31
      %p549 = scmp.lt.s32.totalorder %s29, 1
      %s550 = scalar_select %p549, %s29, 1
      %p551 = scmp.lt.s32.totalorder %s30, 1
      %s552 = scalar_select %p551, %s30, 1
      %p553 = scmp.lt.s32.totalorder %s548, 3
      %s554 = scalar_select %p553, %s548, 3
      %s555 = smul.addr %s554, 2
      %s556 = smul.addr %s552, 8
      %s557 = sadd.s32 %s555, %s556
      %s558 = smul.addr %s550, 16
      %s559 = sadd.s32 %s557, %s558
      %s560 = smul.addr %s559, 8
      %s561 = scalar_lea.vmem %s2, %s560
      %p562 = pneg %p120
      %p563 = pneg %p117
      %p564 = scmp.lt.s32.totalorder %s29, 1
      %s565 = scalar_select %p564, %s29, 1
      %s566 = smul.addr %s565, 2
      %s567 = scalar_lea.vmem %s3, %s566
      %p568 = pneg %p146
      %p569 = pneg %p143
      %p570 = scmp.lt.s32.totalorder %s29, 1
      %s571 = scalar_select %p570, %s29, 1
      %s572 = smul.addr %s571, 64
      %s573 = smul.addr %s572, 4
      %s574 = scalar_lea.vmem %s4, %s573
      %p575 = pneg %p172
      %p576 = pneg %p169
      %p577 = scmp.lt.s32.totalorder %s29, 1
      %s578 = scalar_select %p577, %s29, 1
      %s579 = smul.addr %s578, 4
      %s580 = scalar_lea.vmem %s5, %s579
      %p581 = pneg %p198
      %p582 = pneg %p195
      %p583 = scmp.lt.s32.totalorder %s29, 1
      %s584 = scalar_select %p583, %s29, 1
      %s585 = smul.addr %s584, 16
      %s586 = smul.addr %s585, 4
      %s587 = scalar_lea.vmem %s6, %s586
      %p588 = pneg %p224
      %p589 = pneg %p221
      %p590 = scmp.lt.s32.totalorder %s29, 1
      %s591 = scalar_select %p590, %s29, 1
      %s592 = scalar_lea.vmem %s7, %s591
      %p593 = pneg %p250
      %p594 = pneg %p247
      %p595 = scmp.lt.s32.totalorder %s29, 1
      %s596 = scalar_select %p595, %s29, 1
      %s597 = smul.addr %s596, 2
      %s598 = scalar_lea.vmem %s8, %s597
      %p599 = pneg %p276
      %p600 = pneg %p273
      %p601 = scmp.lt.s32.totalorder %s29, 1
      %s602 = scalar_select %p601, %s29, 1
      %s603 = smul.addr %s602, 32
      %s604 = smul.addr %s603, 4
      %s605 = scalar_lea.vmem %s9, %s604
      %p606 = pneg %p302
      %p607 = pneg %p299
      %p608 = scmp.lt.s32.totalorder %s29, 1
      %s609 = scalar_select %p608, %s29, 1
      %s610 = smul.addr %s609, 2
      %s611 = scalar_lea.vmem %s10, %s610
      %p612 = pneg %p328
      %p613 = pneg %p325
      %p614 = scmp.lt.s32.totalorder %s29, 1
      %s615 = scalar_select %p614, %s29, 1
      %s616 = smul.addr %s615, 32
      %s617 = smul.addr %s616, 4
      %s618 = scalar_lea.vmem %s11, %s617
      %p619 = pneg %p354
      %p620 = pneg %p351
      %p621 = scmp.lt.s32.totalorder %s29, 1
      %s622 = scalar_select %p621, %s29, 1
      %s623 = scalar_lea.vmem %s12, %s622
      %p624 = pneg %p380
      %p625 = pneg %p377
      %p626 = pneg %p406
      %p627 = pneg %p403
      %p628 = scmp.lt.s32.totalorder %s30, 1
      %s629 = scalar_select %p628, %s30, 1
      %s630 = smul.addr %s629, 2
      %s631 = smul.addr %s630, 8
      %s632 = scalar_lea.vmem %s13, %s631
      %p633 = scmp.lt.s32.totalorder %s30, 1
      %s634 = scalar_select %p633, %s30, 1
      %s635 = smul.addr %s634, 2
      %s636 = smul.addr %s635, 8
      %s637 = scalar_lea.vmem %s0, %s636
      %p638 = scmp.lt.s32.totalorder %s30, 1
      %s639 = scalar_select %p638, %s30, 1
      %s640 = scalar_lea.vmem %s1, %s639
      %s641 = smul.u32 2, %s31
      %p642 = scmp.lt.s32.totalorder %s29, 1
      %s643 = scalar_select %p642, %s29, 1
      %p644 = scmp.lt.s32.totalorder %s30, 1
      %s645 = scalar_select %p644, %s30, 1
      %p646 = scmp.lt.s32.totalorder %s641, 3
      %s647 = scalar_select %p646, %s641, 3
      %s648 = smul.addr %s647, 2
      %s649 = smul.addr %s645, 8
      %s650 = sadd.s32 %s648, %s649
      %s651 = smul.addr %s643, 16
      %s652 = sadd.s32 %s650, %s651
      %s653 = smul.addr %s652, 8
      %s654 = scalar_lea.vmem %s2, %s653
      %s655 = smul.u32 2, %s31
      %p656 = scmp.lt.s32.totalorder %s29, 1
      %s657 = scalar_select %p656, %s29, 1
      %s658 = smul.addr %s657, 2
      %s659 = scalar_lea.vmem %s3, %s658
      %p660 = scmp.lt.s32.totalorder %s29, 1
      %s661 = scalar_select %p660, %s29, 1
      %s662 = smul.addr %s661, 64
      %s663 = smul.addr %s662, 4
      %s664 = scalar_lea.vmem %s4, %s663
      %p665 = scmp.lt.s32.totalorder %s29, 1
      %s666 = scalar_select %p665, %s29, 1
      %s667 = smul.addr %s666, 4
      %s668 = scalar_lea.vmem %s5, %s667
      %p669 = scmp.lt.s32.totalorder %s29, 1
      %s670 = scalar_select %p669, %s29, 1
      %s671 = smul.addr %s670, 16
      %s672 = smul.addr %s671, 4
      %s673 = scalar_lea.vmem %s6, %s672
      %p674 = scmp.lt.s32.totalorder %s29, 1
      %s675 = scalar_select %p674, %s29, 1
      %s676 = scalar_lea.vmem %s7, %s675
      %p677 = scmp.lt.s32.totalorder %s29, 1
      %s678 = scalar_select %p677, %s29, 1
      %s679 = smul.addr %s678, 2
      %s680 = scalar_lea.vmem %s8, %s679
      %p681 = scmp.lt.s32.totalorder %s29, 1
      %s682 = scalar_select %p681, %s29, 1
      %s683 = smul.addr %s682, 32
      %s684 = smul.addr %s683, 4
      %s685 = scalar_lea.vmem %s9, %s684
      %p686 = scmp.lt.s32.totalorder %s29, 1
      %s687 = scalar_select %p686, %s29, 1
      %s688 = smul.addr %s687, 2
      %s689 = scalar_lea.vmem %s10, %s688
      %p690 = scmp.lt.s32.totalorder %s29, 1
      %s691 = scalar_select %p690, %s29, 1
      %s692 = smul.addr %s691, 32
      %s693 = smul.addr %s692, 4
      %s694 = scalar_lea.vmem %s11, %s693
      %p695 = scmp.lt.s32.totalorder %s29, 1
      %s696 = scalar_select %p695, %s29, 1
      %s697 = scalar_lea.vmem %s12, %s696
      %p698 = scmp.lt.s32.totalorder %s30, 1
      %s699 = scalar_select %p698, %s30, 1
      %s700 = smul.addr %s699, 2
      %s701 = smul.addr %s700, 8
      %s702 = scalar_lea.vmem %s13, %s701
      %p704 = scmp.eq.s32.totalorder %s29, 0
      %p705 = scmp.eq.s32.totalorder %s31, 0
      %p706 = pnand %p704, %p705
      %p707 = pneg %p706
      // Predicated region
      $region73: #{psm_encoder_forward.1} parent=71 // pred_check
        _
      $region74: #{psm_encoder_forward.1} parent=71 // pred_check_branch
        %709 = sbr.rel (%p706) target = $region76
      $region75: #{psm_encoder_forward.1} parent=71 // pred_region
        %v710 = vld [vmem:[%s637] sm:$0xff]
        %v711 = vld [vmem:[%s637 + $0x8] sm:$0xff]
        %s712 = smul.u32 %s30, 16
        %s713 = scalar_lea.vmem [#allocation2], %s712
        %714 = vst [vmem:[%s713] sm:$0xff] %v710
        %715 = vst [vmem:[%s713 + $0x8] sm:$0xff] %v711
      $region76: #{psm_encoder_forward.1} parent=71 // pred_fallthru
        _
      // Predicated region
      $region77: #{psm_encoder_forward.1} parent=71 // pred_check
        %p716 = pneg %p705
      $region78: #{psm_encoder_forward.1} parent=71 // pred_check_branch
        %718 = sbr.rel (%p716) target = $region80
      $region79: #{psm_encoder_forward.1} parent=71 // pred_region
        %s719 = smul.u32 %s30, 16
        %s720 = scalar_lea.vmem [#allocation2], %s719
        %v721 = vld [vmem:[%s720] sm:$0xff]
        %v722 = vld [vmem:[%s720 + $0x8] sm:$0xff]
        %v723 = vld [vmem:[%s659] sm:$0x3]
        %724 = vadd.xlane.f32.xlu0 %v721
        %v725 = vpop.xlane.xlu0 %724
        %726 = vadd.xlane.f32.xlu0 %v722
        %v727 = vpop.xlane.xlu0 %726
        %v728 = vrcp.pop 128.0
        %v729 = vmul.f32 128.0, %v728
        %v730 = vsub.f32 1.0, %v729
        %v731 = vmul.f32 %v728, %v730
        %v732 = vadd.f32 %v728, %v731
        %vm733 = vweird.f32 %v728
        %v734 = vsel %vm733, %v728, %v732
        %v735 = vmul.f32 %v725, %v734
        %v736 = vmul.f32 %v727, %v734
        %v737 = vsub.f32 %v721, %v735
        %v738 = vsub.f32 %v722, %v736
        %v739 = vmul.f32 %v737, %v737
        %v740 = vmul.f32 %v738, %v738
        %741 = vadd.xlane.f32.xlu0 %v739
        %v742 = vpop.xlane.xlu0 %741
        %743 = vadd.xlane.f32.xlu0 %v740
        %v744 = vpop.xlane.xlu0 %743
        %v745 = vmul.f32 %v742, %v734
        %v746 = vmul.f32 %v744, %v734
        %v747 = vadd.f32 %v745, 1e-05
        %v748 = vadd.f32 %v746, 1e-05
        %v749 = vrsqrt.pop %v747
        %v750 = vmul.f32 %v749, %v747
        %v751 = vmul.f32 %v750, %v749
        %v752 = vmul.f32 0.5, %v751
        %v753 = vsub.f32 1.5, %v752
        %v754 = vmul.f32 %v749, %v753
        %vm755 = vweird.f32 %v747
        %vm756 = vweird.f32 %v749
        %vm757 = vmor %vm755, %vm756
        %v758 = vsel %vm757, %v749, %v754
        %v759 = vrsqrt.pop %v748
        %v760 = vmul.f32 %v759, %v748
        %v761 = vmul.f32 %v760, %v759
        %v762 = vmul.f32 0.5, %v761
        %v763 = vsub.f32 1.5, %v762
        %v764 = vmul.f32 %v759, %v763
        %vm765 = vweird.f32 %v748
        %vm766 = vweird.f32 %v759
        %vm767 = vmor %vm765, %vm766
        %v768 = vsel %vm767, %v759, %v764
        %v769 = vmul.f32 %v737, %v758
        %v770 = vmul.f32 %v738, %v768
        %v771 = vperm.slane %v723, 0
        %v772 = vmul.f32 %v769, %v771
        %v773 = vmul.f32 %v770, %v771
        %v774 = vperm.slane %v723, 1
        %v775 = vadd.f32 %v772, %v774
        %v776 = vadd.f32 %v773, %v774
        %v777 = vpack.c.bf16 %v775, %v775
        %v778 = vpack.c.bf16 %v776, %v776
        %779 = vst [vmem:[#allocation3] sm:$0xf] %v777
        %780 = vst [vmem:[#allocation3 + $0x4] sm:$0xf] %v778
        %781 = vst [vmem:[#allocation4] sm:$0xff] 0.0
        %782 = vst [vmem:[#allocation4 + $0x8] sm:$0xff] 0.0
      $region80: #{psm_encoder_forward.1} parent=71 // pred_fallthru
        _
      %v783 = vld [vmem:[#allocation3] sm:$0xf]
      %v784 = vld [vmem:[#allocation3 + $0x4] sm:$0xf]
      %s785 = smul.u32 %s31, 32
      %s786 = smul.addr %s785, 4
      %s787 = scalar_lea.vmem %s664, %s786
      %v788 = vld [vmem:[%s787] sm:$0xff]
      %v789 = vld [vmem:[%s787 + $0x8] sm:$0xff]
      %v790 = vld [vmem:[%s787 + $0x10] sm:$0xff]
      %v791 = vld [vmem:[%s787 + $0x18] sm:$0xff]
      %v792 = vld [vmem:[%s787 + $0x20] sm:$0xff]
      %v793 = vld [vmem:[%s787 + $0x28] sm:$0xff]
      %v794 = vld [vmem:[%s787 + $0x30] sm:$0xff]
      %v795 = vld [vmem:[%s787 + $0x38] sm:$0xff]
      %v796 = vld [vmem:[%s787 + $0x40] sm:$0xff]
      %v797 = vld [vmem:[%s787 + $0x48] sm:$0xff]
      %v798 = vld [vmem:[%s787 + $0x50] sm:$0xff]
      %v799 = vld [vmem:[%s787 + $0x58] sm:$0xff]
      %v800 = vld [vmem:[%s787 + $0x60] sm:$0xff]
      %v801 = vld [vmem:[%s787 + $0x68] sm:$0xff]
      %v802 = vld [vmem:[%s787 + $0x70] sm:$0xff]
      %v803 = vld [vmem:[%s787 + $0x78] sm:$0xff]
      %s804 = smul.u32 %s31, 2
      %s805 = scalar_lea.vmem %s668, %s804
      %v806 = vld [vmem:[%s805] sm:$0x3]
      %v808 = vperm.slane %v806, 0
      %v809 = vperm.slane %v806, 1
      %v814 = vunpack.c.l.b16 %v783
      %v815 = vunpack.c.l.b16 %v784
      %v816 = vpack.c.b16 %v815, %v814
      %v834 = vunpack.c.l.b16 %v788
      %v835 = vunpack.c.h.b16 %v788
      %v836 = vunpack.c.l.b16 %v789
      %v837 = vunpack.c.h.b16 %v789
      %v838 = vunpack.c.l.b16 %v790
      %v839 = vunpack.c.h.b16 %v790
      %v840 = vunpack.c.l.b16 %v791
      %v841 = vunpack.c.h.b16 %v791
      %v842 = vunpack.c.l.b16 %v792
      %v843 = vunpack.c.h.b16 %v792
      %v844 = vunpack.c.l.b16 %v793
      %v845 = vunpack.c.h.b16 %v793
      %v846 = vunpack.c.l.b16 %v794
      %v847 = vunpack.c.h.b16 %v794
      %v848 = vunpack.c.l.b16 %v795
      %v849 = vunpack.c.h.b16 %v795
      %v850 = vunpack.c.l.b16 %v796
      %v851 = vunpack.c.h.b16 %v796
      %v852 = vunpack.c.l.b16 %v797
      %v853 = vunpack.c.h.b16 %v797
      %v854 = vunpack.c.l.b16 %v798
      %v855 = vunpack.c.h.b16 %v798
      %v856 = vunpack.c.l.b16 %v799
      %v857 = vunpack.c.h.b16 %v799
      %v858 = vunpack.c.l.b16 %v800
      %v859 = vunpack.c.h.b16 %v800
      %v860 = vunpack.c.l.b16 %v801
      %v861 = vunpack.c.h.b16 %v801
      %v862 = vunpack.c.l.b16 %v802
      %v863 = vunpack.c.h.b16 %v802
      %v864 = vunpack.c.l.b16 %v803
      %v865 = vunpack.c.h.b16 %v803
      %v866 = vpack.c.b16 %v836, %v834
      %v867 = vpack.c.b16 %v837, %v835
      %v868 = vpack.c.b16 %v840, %v838
      %v869 = vpack.c.b16 %v841, %v839
      %v870 = vpack.c.b16 %v844, %v842
      %v871 = vpack.c.b16 %v845, %v843
      %v872 = vpack.c.b16 %v848, %v846
      %v873 = vpack.c.b16 %v849, %v847
      %v874 = vpack.c.b16 %v852, %v850
      %v875 = vpack.c.b16 %v853, %v851
      %v876 = vpack.c.b16 %v856, %v854
      %v877 = vpack.c.b16 %v857, %v855
      %v878 = vpack.c.b16 %v860, %v858
      %v879 = vpack.c.b16 %v861, %v859
      %v880 = vpack.c.b16 %v864, %v862
      %v881 = vpack.c.b16 %v865, %v863
      %898 = vmatpush.bf16.msra.mxu0 %v880
      %899 = vmatpush.bf16.msra.mxu0 %v878
      %900 = vmatpush.bf16.msra.mxu0 %v876
      %901 = vmatpush.bf16.msra.mxu0 %v874
      %902 = vmatpush.bf16.msra.mxu0 %v872
      %903 = vmatpush.bf16.msra.mxu0 %v870
      %904 = vmatpush.bf16.msra.mxu0 %v868
      %905 = vmatpush.bf16.msra.mxu0 %v866
      %906 = vmatmul.bf16.gmra.mxu0 %v816
      %v907 = vpop.f32.mrf.mxu0
      %v908 = vadd.f32 %v808, %v907
      %v909 = vpop.f32.mrf.mxu0
      %v910 = vadd.f32 %v808, %v909
      %911 = vdwg.mxu0
      %912 = vmatpush.bf16.msra.mxu0 %v881
      %913 = vmatpush.bf16.msra.mxu0 %v879
      %914 = vmatpush.bf16.msra.mxu0 %v877
      %915 = vmatpush.bf16.msra.mxu0 %v875
      %916 = vmatpush.bf16.msra.mxu0 %v873
      %917 = vmatpush.bf16.msra.mxu0 %v871
      %918 = vmatpush.bf16.msra.mxu0 %v869
      %919 = vmatpush.bf16.msra.mxu0 %v867
      %920 = vmatmul.bf16.gmra.mxu0 %v816
      %v921 = vpop.f32.mrf.mxu0
      %v922 = vadd.f32 %v809, %v921
      %v923 = vpop.f32.mrf.mxu0
      %v924 = vadd.f32 %v809, %v923
      %925 = vdwg.mxu0
      %928 = vrot.lane.b32.xlu0 %v908, 96
      %v929 = vpop.permute.xlu0 %928
      %930 = vrot.lane.b32.xlu0 %v910, 96
      %v931 = vpop.permute.xlu0 %930
      %v934 = vrot.slane %v908, 4
      %vm935 = vcmask 1047556
      %v936 = vsel %vm935, 0.0, %v934
      %v938 = vunpack.c.l.s4 1983009808
      %v939 = vunpack.c.0.s8 %v938
      %v940 = vperm.slane %v908, %v939
      %v942 = vunpack.c.l.s4 1983009808
      %v943 = vunpack.c.0.s8 %v942
      %v944 = vperm.slane %v936, %v943
      %v945 = vrot.slane %v929, 4
      %v946 = vsel %vm935, 0.0, %v945
      %v948 = vunpack.c.l.s4 1983009808
      %v949 = vunpack.c.0.s8 %v948
      %v950 = vperm.slane %v929, %v949
      %v952 = vunpack.c.l.s4 1983009808
      %v953 = vunpack.c.0.s8 %v952
      %v954 = vperm.slane %v946, %v953
      %v955 = vrot.slane %v950, 4
      %v956 = vsel %vm935, %v955, %v940
      %v957 = vrot.slane %v940, 4
      %v958 = vsel %vm935, %v950, %v957
      %v960 = vunpack.c.l.s4 1934713408
      %v961 = vunpack.c.0.s8 %v960
      %v962 = vperm.slane %v956, %v961
      %v964 = vunpack.c.l.s4 1934713408
      %v965 = vunpack.c.0.s8 %v964
      %v966 = vperm.slane %v958, %v965
      %v967 = vrot.slane %v954, 4
      %v968 = vsel %vm935, %v967, %v944
      %v969 = vrot.slane %v944, 4
      %v970 = vsel %vm935, %v954, %v969
      %v972 = vunpack.c.l.s4 1934713408
      %v973 = vunpack.c.0.s8 %v972
      %v974 = vperm.slane %v968, %v973
      %v976 = vunpack.c.l.s4 1934713408
      %v977 = vunpack.c.0.s8 %v976
      %v978 = vperm.slane %v970, %v977
      %v979 = vrot.slane %v962, 4
      %v980 = vsel %vm935, 0.0, %v979
      %v981 = vrot.slane %v966, 4
      %v982 = vsel %vm935, 0.0, %v981
      %v983 = vrot.slane %v974, 4
      %v984 = vsel %vm935, 0.0, %v983
      %v985 = vrot.slane %v978, 4
      %v986 = vsel %vm935, 0.0, %v985
      %v987 = vrot.slane %v910, 4
      %v988 = vsel %vm935, 0.0, %v987
      %v990 = vunpack.c.l.s4 1983009808
      %v991 = vunpack.c.0.s8 %v990
      %v992 = vperm.slane %v910, %v991
      %v994 = vunpack.c.l.s4 1983009808
      %v995 = vunpack.c.0.s8 %v994
      %v996 = vperm.slane %v988, %v995
      %v997 = vrot.slane %v931, 4
      %v998 = vsel %vm935, 0.0, %v997
      %v1000 = vunpack.c.l.s4 1983009808
      %v1001 = vunpack.c.0.s8 %v1000
      %v1002 = vperm.slane %v931, %v1001
      %v1004 = vunpack.c.l.s4 1983009808
      %v1005 = vunpack.c.0.s8 %v1004
      %v1006 = vperm.slane %v998, %v1005
      %v1007 = vrot.slane %v1002, 4
      %v1008 = vsel %vm935, %v1007, %v992
      %v1009 = vrot.slane %v992, 4
      %v1010 = vsel %vm935, %v1002, %v1009
      %v1012 = vunpack.c.l.s4 1934713408
      %v1013 = vunpack.c.0.s8 %v1012
      %v1014 = vperm.slane %v1008, %v1013
      %v1016 = vunpack.c.l.s4 1934713408
      %v1017 = vunpack.c.0.s8 %v1016
      %v1018 = vperm.slane %v1010, %v1017
      %v1019 = vrot.slane %v1006, 4
      %v1020 = vsel %vm935, %v1019, %v996
      %v1021 = vrot.slane %v996, 4
      %v1022 = vsel %vm935, %v1006, %v1021
      %v1024 = vunpack.c.l.s4 1934713408
      %v1025 = vunpack.c.0.s8 %v1024
      %v1026 = vperm.slane %v1020, %v1025
      %v1028 = vunpack.c.l.s4 1934713408
      %v1029 = vunpack.c.0.s8 %v1028
      %v1030 = vperm.slane %v1022, %v1029
      %v1031 = vrot.slane %v1014, 4
      %v1032 = vsel %vm935, 0.0, %v1031
      %v1033 = vrot.slane %v1018, 4
      %v1034 = vsel %vm935, 0.0, %v1033
      %v1035 = vrot.slane %v1026, 4
      %v1036 = vsel %vm935, 0.0, %v1035
      %v1037 = vrot.slane %v1030, 4
      %v1038 = vsel %vm935, 0.0, %v1037
      %v1039 = vsel %vm935, %v981, %v962
      %v1041 = vunpack.c.l.s4 1983009808
      %v1042 = vunpack.c.0.s8 %v1041
      %v1043 = vperm.slane %v1039, %v1042
      %v1044 = vrot.slane %v982, 4
      %v1045 = vsel %vm935, %v1044, %v980
      %v1047 = vunpack.c.l.s4 1983009808
      %v1048 = vunpack.c.0.s8 %v1047
      %v1049 = vperm.slane %v1045, %v1048
      %v1050 = vsel %vm935, %v985, %v974
      %v1052 = vunpack.c.l.s4 1983009808
      %v1053 = vunpack.c.0.s8 %v1052
      %v1054 = vperm.slane %v1050, %v1053
      %v1055 = vrot.slane %v986, 4
      %v1056 = vsel %vm935, %v1055, %v984
      %v1058 = vunpack.c.l.s4 1983009808
      %v1059 = vunpack.c.0.s8 %v1058
      %v1060 = vperm.slane %v1056, %v1059
      %v1061 = vrot.slane %v1049, 4
      %v1062 = vsel %vm935, %v1061, %v1043
      %v1064 = vunpack.c.l.s4 1934713408
      %v1065 = vunpack.c.0.s8 %v1064
      %v1066 = vperm.slane %v1062, %v1065
      %v1067 = vrot.slane %v1060, 4
      %v1068 = vsel %vm935, %v1067, %v1054
      %v1070 = vunpack.c.l.s4 1934713408
      %v1071 = vunpack.c.0.s8 %v1070
      %v1072 = vperm.slane %v1068, %v1071
      %v1073 = vrot.slane %v1072, 4
      %v1074 = vsel %vm935, %v1073, %v1066
      %v1075 = vrot.slane %v1066, 4
      %v1076 = vsel %vm935, %v1072, %v1075
      %v1077 = vsel %vm935, %v1033, %v1014
      %v1079 = vunpack.c.l.s4 1983009808
      %v1080 = vunpack.c.0.s8 %v1079
      %v1081 = vperm.slane %v1077, %v1080
      %v1082 = vrot.slane %v1034, 4
      %v1083 = vsel %vm935, %v1082, %v1032
      %v1085 = vunpack.c.l.s4 1983009808
      %v1086 = vunpack.c.0.s8 %v1085
      %v1087 = vperm.slane %v1083, %v1086
      %v1088 = vsel %vm935, %v1037, %v1026
      %v1090 = vunpack.c.l.s4 1983009808
      %v1091 = vunpack.c.0.s8 %v1090
      %v1092 = vperm.slane %v1088, %v1091
      %v1093 = vrot.slane %v1038, 4
      %v1094 = vsel %vm935, %v1093, %v1036
      %v1096 = vunpack.c.l.s4 1983009808
      %v1097 = vunpack.c.0.s8 %v1096
      %v1098 = vperm.slane %v1094, %v1097
      %v1099 = vrot.slane %v1087, 4
      %v1100 = vsel %vm935, %v1099, %v1081
      %v1102 = vunpack.c.l.s4 1934713408
      %v1103 = vunpack.c.0.s8 %v1102
      %v1104 = vperm.slane %v1100, %v1103
      %v1105 = vrot.slane %v1098, 4
      %v1106 = vsel %vm935, %v1105, %v1092
      %v1108 = vunpack.c.l.s4 1934713408
      %v1109 = vunpack.c.0.s8 %v1108
      %v1110 = vperm.slane %v1106, %v1109
      %v1111 = vrot.slane %v1110, 4
      %v1112 = vsel %vm935, %v1111, %v1104
      %v1113 = vrot.slane %v1104, 4
      %v1114 = vsel %vm935, %v1110, %v1113
      %1115 = vrot.lane.b32.xlu0 %v908, 64
      %v1116 = vpop.permute.xlu0 %1115
      %1117 = vrot.lane.b32.xlu0 %v910, 64
      %v1118 = vpop.permute.xlu0 %1117
      %1119 = vrot.lane.b32.xlu0 %v929, 64
      %v1120 = vpop.permute.xlu0 %1119
      %1121 = vrot.lane.b32.xlu0 %v931, 64
      %v1122 = vpop.permute.xlu0 %1121
      %v1127 = vrot.slane %v1116, 4
      %v1128 = vsel %vm935, 0.0, %v1127
      %v1130 = vunpack.c.l.s4 1983009808
      %v1131 = vunpack.c.0.s8 %v1130
      %v1132 = vperm.slane %v1116, %v1131
      %v1134 = vunpack.c.l.s4 1983009808
      %v1135 = vunpack.c.0.s8 %v1134
      %v1136 = vperm.slane %v1128, %v1135
      %v1137 = vrot.slane %v1120, 4
      %v1138 = vsel %vm935, 0.0, %v1137
      %v1140 = vunpack.c.l.s4 1983009808
      %v1141 = vunpack.c.0.s8 %v1140
      %v1142 = vperm.slane %v1120, %v1141
      %v1144 = vunpack.c.l.s4 1983009808
      %v1145 = vunpack.c.0.s8 %v1144
      %v1146 = vperm.slane %v1138, %v1145
      %v1147 = vrot.slane %v1142, 4
      %v1148 = vsel %vm935, %v1147, %v1132
      %v1149 = vrot.slane %v1132, 4
      %v1150 = vsel %vm935, %v1142, %v1149
      %v1152 = vunpack.c.l.s4 1934713408
      %v1153 = vunpack.c.0.s8 %v1152
      %v1154 = vperm.slane %v1148, %v1153
      %v1156 = vunpack.c.l.s4 1934713408
      %v1157 = vunpack.c.0.s8 %v1156
      %v1158 = vperm.slane %v1150, %v1157
      %v1159 = vrot.slane %v1146, 4
      %v1160 = vsel %vm935, %v1159, %v1136
      %v1161 = vrot.slane %v1136, 4
      %v1162 = vsel %vm935, %v1146, %v1161
      %v1164 = vunpack.c.l.s4 1934713408
      %v1165 = vunpack.c.0.s8 %v1164
      %v1166 = vperm.slane %v1160, %v1165
      %v1168 = vunpack.c.l.s4 1934713408
      %v1169 = vunpack.c.0.s8 %v1168
      %v1170 = vperm.slane %v1162, %v1169
      %v1171 = vrot.slane %v1154, 4
      %v1172 = vsel %vm935, 0.0, %v1171
      %v1173 = vrot.slane %v1158, 4
      %v1174 = vsel %vm935, 0.0, %v1173
      %v1175 = vrot.slane %v1166, 4
      %v1176 = vsel %vm935, 0.0, %v1175
      %v1177 = vrot.slane %v1170, 4
      %v1178 = vsel %vm935, 0.0, %v1177
      %v1179 = vrot.slane %v1118, 4
      %v1180 = vsel %vm935, 0.0, %v1179
      %v1182 = vunpack.c.l.s4 1983009808
      %v1183 = vunpack.c.0.s8 %v1182
      %v1184 = vperm.slane %v1118, %v1183
      %v1186 = vunpack.c.l.s4 1983009808
      %v1187 = vunpack.c.0.s8 %v1186
      %v1188 = vperm.slane %v1180, %v1187
      %v1189 = vrot.slane %v1122, 4
      %v1190 = vsel %vm935, 0.0, %v1189
      %v1192 = vunpack.c.l.s4 1983009808
      %v1193 = vunpack.c.0.s8 %v1192
      %v1194 = vperm.slane %v1122, %v1193
      %v1196 = vunpack.c.l.s4 1983009808
      %v1197 = vunpack.c.0.s8 %v1196
      %v1198 = vperm.slane %v1190, %v1197
      %v1199 = vrot.slane %v1194, 4
      %v1200 = vsel %vm935, %v1199, %v1184
      %v1201 = vrot.slane %v1184, 4
      %v1202 = vsel %vm935, %v1194, %v1201
      %v1204 = vunpack.c.l.s4 1934713408
      %v1205 = vunpack.c.0.s8 %v1204
      %v1206 = vperm.slane %v1200, %v1205
      %v1208 = vunpack.c.l.s4 1934713408
      %v1209 = vunpack.c.0.s8 %v1208
      %v1210 = vperm.slane %v1202, %v1209
      %v1211 = vrot.slane %v1198, 4
      %v1212 = vsel %vm935, %v1211, %v1188
      %v1213 = vrot.slane %v1188, 4
      %v1214 = vsel %vm935, %v1198, %v1213
      %v1216 = vunpack.c.l.s4 1934713408
      %v1217 = vunpack.c.0.s8 %v1216
      %v1218 = vperm.slane %v1212, %v1217
      %v1220 = vunpack.c.l.s4 1934713408
      %v1221 = vunpack.c.0.s8 %v1220
      %v1222 = vperm.slane %v1214, %v1221
      %v1223 = vrot.slane %v1206, 4
      %v1224 = vsel %vm935, 0.0, %v1223
      %v1225 = vrot.slane %v1210, 4
      %v1226 = vsel %vm935, 0.0, %v1225
      %v1227 = vrot.slane %v1218, 4
      %v1228 = vsel %vm935, 0.0, %v1227
      %v1229 = vrot.slane %v1222, 4
      %v1230 = vsel %vm935, 0.0, %v1229
      %v1231 = vsel %vm935, %v1173, %v1154
      %v1233 = vunpack.c.l.s4 1983009808
      %v1234 = vunpack.c.0.s8 %v1233
      %v1235 = vperm.slane %v1231, %v1234
      %v1236 = vrot.slane %v1174, 4
      %v1237 = vsel %vm935, %v1236, %v1172
      %v1239 = vunpack.c.l.s4 1983009808
      %v1240 = vunpack.c.0.s8 %v1239
      %v1241 = vperm.slane %v1237, %v1240
      %v1242 = vsel %vm935, %v1177, %v1166
      %v1244 = vunpack.c.l.s4 1983009808
      %v1245 = vunpack.c.0.s8 %v1244
      %v1246 = vperm.slane %v1242, %v1245
      %v1247 = vrot.slane %v1178, 4
      %v1248 = vsel %vm935, %v1247, %v1176
      %v1250 = vunpack.c.l.s4 1983009808
      %v1251 = vunpack.c.0.s8 %v1250
      %v1252 = vperm.slane %v1248, %v1251
      %v1253 = vrot.slane %v1241, 4
      %v1254 = vsel %vm935, %v1253, %v1235
      %v1256 = vunpack.c.l.s4 1934713408
      %v1257 = vunpack.c.0.s8 %v1256
      %v1258 = vperm.slane %v1254, %v1257
      %v1259 = vrot.slane %v1252, 4
      %v1260 = vsel %vm935, %v1259, %v1246
      %v1262 = vunpack.c.l.s4 1934713408
      %v1263 = vunpack.c.0.s8 %v1262
      %v1264 = vperm.slane %v1260, %v1263
      %v1265 = vrot.slane %v1264, 4
      %v1266 = vsel %vm935, %v1265, %v1258
      %v1267 = vrot.slane %v1258, 4
      %v1268 = vsel %vm935, %v1264, %v1267
      %v1269 = vsel %vm935, %v1225, %v1206
      %v1271 = vunpack.c.l.s4 1983009808
      %v1272 = vunpack.c.0.s8 %v1271
      %v1273 = vperm.slane %v1269, %v1272
      %v1274 = vrot.slane %v1226, 4
      %v1275 = vsel %vm935, %v1274, %v1224
      %v1277 = vunpack.c.l.s4 1983009808
      %v1278 = vunpack.c.0.s8 %v1277
      %v1279 = vperm.slane %v1275, %v1278
      %v1280 = vsel %vm935, %v1229, %v1218
      %v1282 = vunpack.c.l.s4 1983009808
      %v1283 = vunpack.c.0.s8 %v1282
      %v1284 = vperm.slane %v1280, %v1283
      %v1285 = vrot.slane %v1230, 4
      %v1286 = vsel %vm935, %v1285, %v1228
      %v1288 = vunpack.c.l.s4 1983009808
      %v1289 = vunpack.c.0.s8 %v1288
      %v1290 = vperm.slane %v1286, %v1289
      %v1291 = vrot.slane %v1279, 4
      %v1292 = vsel %vm935, %v1291, %v1273
      %v1294 = vunpack.c.l.s4 1934713408
      %v1295 = vunpack.c.0.s8 %v1294
      %v1296 = vperm.slane %v1292, %v1295
      %v1297 = vrot.slane %v1290, 4
      %v1298 = vsel %vm935, %v1297, %v1284
      %v1300 = vunpack.c.l.s4 1934713408
      %v1301 = vunpack.c.0.s8 %v1300
      %v1302 = vperm.slane %v1298, %v1301
      %v1303 = vrot.slane %v1302, 4
      %v1304 = vsel %vm935, %v1303, %v1296
      %v1305 = vrot.slane %v1296, 4
      %v1306 = vsel %vm935, %v1302, %v1305
      %1309 = vrot.lane.b32.xlu0 %v922, 96
      %v1310 = vpop.permute.xlu0 %1309
      %1311 = vrot.lane.b32.xlu0 %v924, 96
      %v1312 = vpop.permute.xlu0 %1311
      %v1315 = vrot.slane %v922, 4
      %v1316 = vsel %vm935, 0.0, %v1315
      %v1318 = vunpack.c.l.s4 1983009808
      %v1319 = vunpack.c.0.s8 %v1318
      %v1320 = vperm.slane %v922, %v1319
      %v1322 = vunpack.c.l.s4 1983009808
      %v1323 = vunpack.c.0.s8 %v1322
      %v1324 = vperm.slane %v1316, %v1323
      %v1325 = vrot.slane %v1310, 4
      %v1326 = vsel %vm935, 0.0, %v1325
      %v1328 = vunpack.c.l.s4 1983009808
      %v1329 = vunpack.c.0.s8 %v1328
      %v1330 = vperm.slane %v1310, %v1329
      %v1332 = vunpack.c.l.s4 1983009808
      %v1333 = vunpack.c.0.s8 %v1332
      %v1334 = vperm.slane %v1326, %v1333
      %v1335 = vrot.slane %v1330, 4
      %v1336 = vsel %vm935, %v1335, %v1320
      %v1337 = vrot.slane %v1320, 4
      %v1338 = vsel %vm935, %v1330, %v1337
      %v1340 = vunpack.c.l.s4 1934713408
      %v1341 = vunpack.c.0.s8 %v1340
      %v1342 = vperm.slane %v1336, %v1341
      %v1344 = vunpack.c.l.s4 1934713408
      %v1345 = vunpack.c.0.s8 %v1344
      %v1346 = vperm.slane %v1338, %v1345
      %v1347 = vrot.slane %v1334, 4
      %v1348 = vsel %vm935, %v1347, %v1324
      %v1349 = vrot.slane %v1324, 4
      %v1350 = vsel %vm935, %v1334, %v1349
      %v1352 = vunpack.c.l.s4 1934713408
      %v1353 = vunpack.c.0.s8 %v1352
      %v1354 = vperm.slane %v1348, %v1353
      %v1356 = vunpack.c.l.s4 1934713408
      %v1357 = vunpack.c.0.s8 %v1356
      %v1358 = vperm.slane %v1350, %v1357
      %v1359 = vrot.slane %v1342, 4
      %v1360 = vsel %vm935, 0.0, %v1359
      %v1361 = vrot.slane %v1346, 4
      %v1362 = vsel %vm935, 0.0, %v1361
      %v1363 = vrot.slane %v1354, 4
      %v1364 = vsel %vm935, 0.0, %v1363
      %v1365 = vrot.slane %v1358, 4
      %v1366 = vsel %vm935, 0.0, %v1365
      %v1367 = vrot.slane %v924, 4
      %v1368 = vsel %vm935, 0.0, %v1367
      %v1370 = vunpack.c.l.s4 1983009808
      %v1371 = vunpack.c.0.s8 %v1370
      %v1372 = vperm.slane %v924, %v1371
      %v1374 = vunpack.c.l.s4 1983009808
      %v1375 = vunpack.c.0.s8 %v1374
      %v1376 = vperm.slane %v1368, %v1375
      %v1377 = vrot.slane %v1312, 4
      %v1378 = vsel %vm935, 0.0, %v1377
      %v1380 = vunpack.c.l.s4 1983009808
      %v1381 = vunpack.c.0.s8 %v1380
      %v1382 = vperm.slane %v1312, %v1381
      %v1384 = vunpack.c.l.s4 1983009808
      %v1385 = vunpack.c.0.s8 %v1384
      %v1386 = vperm.slane %v1378, %v1385
      %v1387 = vrot.slane %v1382, 4
      %v1388 = vsel %vm935, %v1387, %v1372
      %v1389 = vrot.slane %v1372, 4
      %v1390 = vsel %vm935, %v1382, %v1389
      %v1392 = vunpack.c.l.s4 1934713408
      %v1393 = vunpack.c.0.s8 %v1392
      %v1394 = vperm.slane %v1388, %v1393
      %v1396 = vunpack.c.l.s4 1934713408
      %v1397 = vunpack.c.0.s8 %v1396
      %v1398 = vperm.slane %v1390, %v1397
      %v1399 = vrot.slane %v1386, 4
      %v1400 = vsel %vm935, %v1399, %v1376
      %v1401 = vrot.slane %v1376, 4
      %v1402 = vsel %vm935, %v1386, %v1401
      %v1404 = vunpack.c.l.s4 1934713408
      %v1405 = vunpack.c.0.s8 %v1404
      %v1406 = vperm.slane %v1400, %v1405
      %v1408 = vunpack.c.l.s4 1934713408
      %v1409 = vunpack.c.0.s8 %v1408
      %v1410 = vperm.slane %v1402, %v1409
      %v1411 = vrot.slane %v1394, 4
      %v1412 = vsel %vm935, 0.0, %v1411
      %v1413 = vrot.slane %v1398, 4
      %v1414 = vsel %vm935, 0.0, %v1413
      %v1415 = vrot.slane %v1406, 4
      %v1416 = vsel %vm935, 0.0, %v1415
      %v1417 = vrot.slane %v1410, 4
      %v1418 = vsel %vm935, 0.0, %v1417
      %v1419 = vsel %vm935, %v1361, %v1342
      %v1421 = vunpack.c.l.s4 1983009808
      %v1422 = vunpack.c.0.s8 %v1421
      %v1423 = vperm.slane %v1419, %v1422
      %v1424 = vrot.slane %v1362, 4
      %v1425 = vsel %vm935, %v1424, %v1360
      %v1427 = vunpack.c.l.s4 1983009808
      %v1428 = vunpack.c.0.s8 %v1427
      %v1429 = vperm.slane %v1425, %v1428
      %v1430 = vsel %vm935, %v1365, %v1354
      %v1432 = vunpack.c.l.s4 1983009808
      %v1433 = vunpack.c.0.s8 %v1432
      %v1434 = vperm.slane %v1430, %v1433
      %v1435 = vrot.slane %v1366, 4
      %v1436 = vsel %vm935, %v1435, %v1364
      %v1438 = vunpack.c.l.s4 1983009808
      %v1439 = vunpack.c.0.s8 %v1438
      %v1440 = vperm.slane %v1436, %v1439
      %v1441 = vrot.slane %v1429, 4
      %v1442 = vsel %vm935, %v1441, %v1423
      %v1444 = vunpack.c.l.s4 1934713408
      %v1445 = vunpack.c.0.s8 %v1444
      %v1446 = vperm.slane %v1442, %v1445
      %v1447 = vrot.slane %v1440, 4
      %v1448 = vsel %vm935, %v1447, %v1434
      %v1450 = vunpack.c.l.s4 1934713408
      %v1451 = vunpack.c.0.s8 %v1450
      %v1452 = vperm.slane %v1448, %v1451
      %v1453 = vrot.slane %v1452, 4
      %v1454 = vsel %vm935, %v1453, %v1446
      %v1455 = vrot.slane %v1446, 4
      %v1456 = vsel %vm935, %v1452, %v1455
      %v1457 = vsel %vm935, %v1413, %v1394
      %v1459 = vunpack.c.l.s4 1983009808
      %v1460 = vunpack.c.0.s8 %v1459
      %v1461 = vperm.slane %v1457, %v1460
      %v1462 = vrot.slane %v1414, 4
      %v1463 = vsel %vm935, %v1462, %v1412
      %v1465 = vunpack.c.l.s4 1983009808
      %v1466 = vunpack.c.0.s8 %v1465
      %v1467 = vperm.slane %v1463, %v1466
      %v1468 = vsel %vm935, %v1417, %v1406
      %v1470 = vunpack.c.l.s4 1983009808
      %v1471 = vunpack.c.0.s8 %v1470
      %v1472 = vperm.slane %v1468, %v1471
      %v1473 = vrot.slane %v1418, 4
      %v1474 = vsel %vm935, %v1473, %v1416
      %v1476 = vunpack.c.l.s4 1983009808
      %v1477 = vunpack.c.0.s8 %v1476
      %v1478 = vperm.slane %v1474, %v1477
      %v1479 = vrot.slane %v1467, 4
      %v1480 = vsel %vm935, %v1479, %v1461
      %v1482 = vunpack.c.l.s4 1934713408
      %v1483 = vunpack.c.0.s8 %v1482
      %v1484 = vperm.slane %v1480, %v1483
      %v1485 = vrot.slane %v1478, 4
      %v1486 = vsel %vm935, %v1485, %v1472
      %v1488 = vunpack.c.l.s4 1934713408
      %v1489 = vunpack.c.0.s8 %v1488
      %v1490 = vperm.slane %v1486, %v1489
      %v1491 = vrot.slane %v1490, 4
      %v1492 = vsel %vm935, %v1491, %v1484
      %v1493 = vrot.slane %v1484, 4
      %v1494 = vsel %vm935, %v1490, %v1493
      %v1495 = vpack.c.bf16 %v1074, %v1074
      %v1496 = vpack.c.bf16 %v1112, %v1112
      %v1497 = vpack.c.bf16 %v1076, %v1076
      %v1498 = vpack.c.bf16 %v1114, %v1114
      %v1499 = vpack.c.bf16 %v1266, %v1266
      %v1500 = vpack.c.bf16 %v1304, %v1304
      %v1501 = vpack.c.bf16 %v1268, %v1268
      %v1502 = vpack.c.bf16 %v1306, %v1306
      %v1503 = vld [vmem:[%s654] sm:$0xff]
      %v1504 = vld [vmem:[%s654 + $0x8] sm:$0xff]
      %v1505 = vld [vmem:[%s654 + $0x10] sm:$0xff]
      %v1506 = vld [vmem:[%s654 + $0x18] sm:$0xff]
      %v1509 = vunpack.c.l.b16 %v1495
      %v1510 = vunpack.c.l.b16 %v1496
      %v1511 = vpack.c.b16 %v1510, %v1509
      %v1514 = vunpack.c.l.b16 %v1499
      %v1515 = vunpack.c.l.b16 %v1500
      %v1516 = vpack.c.b16 %v1515, %v1514
      %vm1517 = vcmask 261120
      %v1519 = vsel %vm1517, %v1511, 0
      %v1522 = vsel %vm1517, %v1516, 0
      %1524 = vmatpush.bf16.xpose.msra.mxu0 0
      %1525 = vmatpush.bf16.xpose.msra.mxu0 0
      %1526 = vmatpush.bf16.xpose.msra.mxu0 0
      %1527 = vmatpush.bf16.xpose.msra.mxu0 0
      %1528 = vmatpush.bf16.xpose.msra.mxu0 0
      %1529 = vmatpush.bf16.xpose.msra.mxu0 0
      %1530 = vmatpush.bf16.xpose.msra.mxu0 0
      %1531 = vmatpush.bf16.xpose.msra.mxu0 %v1522
      %1532 = vmatmul.bf16.gmra.mxu0 %v1519
      %v1533 = vpop.f32.mrf.mxu0
      %v1534 = vadd.f32 %v1503, %v1533
      %v1535 = vpop.f32.mrf.mxu0
      %v1536 = vadd.f32 %v1504, %v1535
      %1537 = vdwg.mxu0
      %v1540 = vunpack.c.l.b16 %v1497
      %v1541 = vunpack.c.l.b16 %v1498
      %v1542 = vpack.c.b16 %v1541, %v1540
      %v1545 = vunpack.c.l.b16 %v1501
      %v1546 = vunpack.c.l.b16 %v1502
      %v1547 = vpack.c.b16 %v1546, %v1545
      %v1549 = vsel %vm1517, %v1542, 0
      %v1552 = vsel %vm1517, %v1547, 0
      %1554 = vmatpush.bf16.xpose.msra.mxu0 0
      %1555 = vmatpush.bf16.xpose.msra.mxu0 0
      %1556 = vmatpush.bf16.xpose.msra.mxu0 0
      %1557 = vmatpush.bf16.xpose.msra.mxu0 0
      %1558 = vmatpush.bf16.xpose.msra.mxu0 0
      %1559 = vmatpush.bf16.xpose.msra.mxu0 0
      %1560 = vmatpush.bf16.xpose.msra.mxu0 0
      %1561 = vmatpush.bf16.xpose.msra.mxu0 %v1552
      %1562 = vmatmul.bf16.gmra.mxu0 %v1549
      %v1563 = vpop.f32.mrf.mxu0
      %v1564 = vadd.f32 %v1505, %v1563
      %v1565 = vpop.f32.mrf.mxu0
      %v1566 = vadd.f32 %v1506, %v1565
      %1567 = vdwg.mxu0
      %v1568 = vld [vmem:[%s640] sm:$0x1]
      %v1570 = vperm.slane %v1568, 0
      %v1572 = vadd.f32 %v1534, %v1570
      %v1573 = vadd.f32 %v1536, %v1570
      %v1574 = vadd.f32 %v1564, %v1570
      %v1575 = vadd.f32 %v1566, %v1570
      %vm1576 = vcmask 130048
      %v1577 = vsel %vm1576, %v1572, -inf
      %1578 = vmax.xlane.f32.xlu0 %v1577
      %v1579 = vpop.xlane.xlu0 %1578
      %v1580 = vsel %vm1576, %v1573, -inf
      %1581 = vmax.xlane.f32.xlu0 %v1580
      %v1582 = vpop.xlane.xlu0 %1581
      %v1583 = vsel %vm1576, %v1574, -inf
      %1584 = vmax.xlane.f32.xlu0 %v1583
      %v1585 = vpop.xlane.xlu0 %1584
      %v1586 = vsel %vm1576, %v1575, -inf
      %1587 = vmax.xlane.f32.xlu0 %v1586
      %v1588 = vpop.xlane.xlu0 %1587
      %v1589 = vsub.f32 %v1572, %v1579
      %v1590 = vsub.f32 %v1573, %v1582
      %v1591 = vsub.f32 %v1574, %v1585
      %v1592 = vsub.f32 %v1575, %v1588
      %v1593 = vmul.f32 %v1589, 1.442695
      %v1594 = vpow.pop %v1593
      %v1595 = vmul.f32 %v1590, 1.442695
      %v1596 = vpow.pop %v1595
      %v1597 = vmul.f32 %v1591, 1.442695
      %v1598 = vpow.pop %v1597
      %v1599 = vmul.f32 %v1592, 1.442695
      %v1600 = vpow.pop %v1599
      %v1601 = vsel %vm1576, %v1594, 0.0
      %1602 = vadd.xlane.f32.xlu0 %v1601
      %v1603 = vpop.xlane.xlu0 %1602
      %v1604 = vsel %vm1576, %v1596, 0.0
      %1605 = vadd.xlane.f32.xlu0 %v1604
      %v1606 = vpop.xlane.xlu0 %1605
      %v1607 = vsel %vm1576, %v1598, 0.0
      %1608 = vadd.xlane.f32.xlu0 %v1607
      %v1609 = vpop.xlane.xlu0 %1608
      %v1610 = vsel %vm1576, %v1600, 0.0
      %1611 = vadd.xlane.f32.xlu0 %v1610
      %v1612 = vpop.xlane.xlu0 %1611
      %v1613 = vpack.c.bf16 %v1594, %v1594
      %v1614 = vpack.c.bf16 %v1596, %v1596
      %v1615 = vpack.c.bf16 %v1598, %v1598
      %v1616 = vpack.c.bf16 %v1600, %v1600
      %v1617 = vpack.c.bf16 %v1454, %v1454
      %v1618 = vpack.c.bf16 %v1492, %v1492
      %v1619 = vpack.c.bf16 %v1456, %v1456
      %v1620 = vpack.c.bf16 %v1494, %v1494
      %v1623 = vunpack.c.l.b16 %v1613
      %v1624 = vunpack.c.l.b16 %v1614
      %v1625 = vpack.c.b16 %v1624, %v1623
      %v1628 = vunpack.c.l.b16 %v1617
      %v1629 = vunpack.c.l.b16 %v1618
      %v1630 = vpack.c.b16 %v1629, %v1628
      %v1633 = vsel %vm1576, %v1625, 0
      %1635 = vmatpush.bf16.msra.mxu0 0
      %1636 = vmatpush.bf16.msra.mxu0 0
      %1637 = vmatpush.bf16.msra.mxu0 0
      %1638 = vmatpush.bf16.msra.mxu0 0
      %1639 = vmatpush.bf16.msra.mxu0 0
      %1640 = vmatpush.bf16.msra.mxu0 0
      %1641 = vmatpush.bf16.msra.mxu0 0
      %1642 = vmatpush.bf16.msra.mxu0 %v1630
      %1643 = vmatmul.bf16.gmra.mxu0 %v1633
      %v1644 = vpop.f32.mrf.mxu0
      %v1645 = vadd.f32 0.0, %v1644
      %v1646 = vpop.f32.mrf.mxu0
      %v1647 = vadd.f32 0.0, %v1646
      %1648 = vdwg.mxu0
      %v1651 = vunpack.c.l.b16 %v1615
      %v1652 = vunpack.c.l.b16 %v1616
      %v1653 = vpack.c.b16 %v1652, %v1651
      %v1656 = vunpack.c.l.b16 %v1619
      %v1657 = vunpack.c.l.b16 %v1620
      %v1658 = vpack.c.b16 %v1657, %v1656
      %v1661 = vsel %vm1576, %v1653, 0
      %1663 = vmatpush.bf16.msra.mxu0 0
      %1664 = vmatpush.bf16.msra.mxu0 0
      %1665 = vmatpush.bf16.msra.mxu0 0
      %1666 = vmatpush.bf16.msra.mxu0 0
      %1667 = vmatpush.bf16.msra.mxu0 0
      %1668 = vmatpush.bf16.msra.mxu0 0
      %1669 = vmatpush.bf16.msra.mxu0 0
      %1670 = vmatpush.bf16.msra.mxu0 %v1658
      %1671 = vmatmul.bf16.gmra.mxu0 %v1661
      %v1672 = vpop.f32.mrf.mxu0
      %v1673 = vadd.f32 0.0, %v1672
      %v1674 = vpop.f32.mrf.mxu0
      %v1675 = vadd.f32 0.0, %v1674
      %1676 = vdwg.mxu0
      %v1677 = vrcp.pop %v1603
      %v1678 = vmul.f32 %v1603, %v1677
      %v1679 = vsub.f32 1.0, %v1678
      %v1680 = vmul.f32 %v1677, %v1679
      %v1681 = vadd.f32 %v1677, %v1680
      %vm1682 = vweird.f32 %v1603
      %vm1683 = vweird.f32 %v1677
      %vm1684 = vmor %vm1682, %vm1683
      %v1685 = vsel %vm1684, %v1677, %v1681
      %v1686 = vand.u32 2147483647, %v1603
      %vm1687 = vcmp.eq.f32.partialorder %v1686, 8.507059e+37
      %v1688 = vand.u32 %v1603, 2147483648
      %v1689 = vor.u32 1.1754944e-38, %v1688
      %v1690 = vsel %vm1687, %v1689, %v1685
      %v1691 = vmul.f32 %v1645, %v1690
      %v1692 = vrcp.pop %v1606
      %v1693 = vmul.f32 %v1606, %v1692
      %v1694 = vsub.f32 1.0, %v1693
      %v1695 = vmul.f32 %v1692, %v1694
      %v1696 = vadd.f32 %v1692, %v1695
      %vm1697 = vweird.f32 %v1606
      %vm1698 = vweird.f32 %v1692
      %vm1699 = vmor %vm1697, %vm1698
      %v1700 = vsel %vm1699, %v1692, %v1696
      %v1701 = vand.u32 2147483647, %v1606
      %vm1702 = vcmp.eq.f32.partialorder %v1701, 8.507059e+37
      %v1703 = vand.u32 %v1606, 2147483648
      %v1704 = vor.u32 1.1754944e-38, %v1703
      %v1705 = vsel %vm1702, %v1704, %v1700
      %v1706 = vmul.f32 %v1647, %v1705
      %v1707 = vrcp.pop %v1609
      %v1708 = vmul.f32 %v1609, %v1707
      %v1709 = vsub.f32 1.0, %v1708
      %v1710 = vmul.f32 %v1707, %v1709
      %v1711 = vadd.f32 %v1707, %v1710
      %vm1712 = vweird.f32 %v1609
      %vm1713 = vweird.f32 %v1707
      %vm1714 = vmor %vm1712, %vm1713
      %v1715 = vsel %vm1714, %v1707, %v1711
      %v1716 = vand.u32 2147483647, %v1609
      %vm1717 = vcmp.eq.f32.partialorder %v1716, 8.507059e+37
      %v1718 = vand.u32 %v1609, 2147483648
      %v1719 = vor.u32 1.1754944e-38, %v1718
      %v1720 = vsel %vm1717, %v1719, %v1715
      %v1721 = vmul.f32 %v1673, %v1720
      %v1722 = vrcp.pop %v1612
      %v1723 = vmul.f32 %v1612, %v1722
      %v1724 = vsub.f32 1.0, %v1723
      %v1725 = vmul.f32 %v1722, %v1724
      %v1726 = vadd.f32 %v1722, %v1725
      %vm1727 = vweird.f32 %v1612
      %vm1728 = vweird.f32 %v1722
      %vm1729 = vmor %vm1727, %vm1728
      %v1730 = vsel %vm1729, %v1722, %v1726
      %v1731 = vand.u32 2147483647, %v1612
      %vm1732 = vcmp.eq.f32.partialorder %v1731, 8.507059e+37
      %v1733 = vand.u32 %v1612, 2147483648
      %v1734 = vor.u32 1.1754944e-38, %v1733
      %v1735 = vsel %vm1732, %v1734, %v1730
      %v1736 = vmul.f32 %v1675, %v1735
      %v1737 = vrot.slane %v1691, 4
      %v1738 = vsel %vm935, 0.0, %v1737
      %v1740 = vunpack.c.l.s4 1983009808
      %v1741 = vunpack.c.0.s8 %v1740
      %v1742 = vperm.slane %v1691, %v1741
      %v1744 = vunpack.c.l.s4 1983009808
      %v1745 = vunpack.c.0.s8 %v1744
      %v1746 = vperm.slane %v1738, %v1745
      %v1747 = vrot.slane %v1721, 4
      %v1748 = vsel %vm935, 0.0, %v1747
      %v1750 = vunpack.c.l.s4 1983009808
      %v1751 = vunpack.c.0.s8 %v1750
      %v1752 = vperm.slane %v1721, %v1751
      %v1754 = vunpack.c.l.s4 1983009808
      %v1755 = vunpack.c.0.s8 %v1754
      %v1756 = vperm.slane %v1748, %v1755
      %v1757 = vrot.slane %v1752, 4
      %v1758 = vsel %vm935, %v1757, %v1742
      %v1759 = vrot.slane %v1742, 4
      %v1760 = vsel %vm935, %v1752, %v1759
      %v1762 = vunpack.c.l.s4 1934713408
      %v1763 = vunpack.c.0.s8 %v1762
      %v1764 = vperm.slane %v1758, %v1763
      %v1766 = vunpack.c.l.s4 1934713408
      %v1767 = vunpack.c.0.s8 %v1766
      %v1768 = vperm.slane %v1760, %v1767
      %v1769 = vrot.slane %v1756, 4
      %v1770 = vsel %vm935, %v1769, %v1746
      %v1771 = vrot.slane %v1746, 4
      %v1772 = vsel %vm935, %v1756, %v1771
      %v1774 = vunpack.c.l.s4 1934713408
      %v1775 = vunpack.c.0.s8 %v1774
      %v1776 = vperm.slane %v1770, %v1775
      %v1778 = vunpack.c.l.s4 1934713408
      %v1779 = vunpack.c.0.s8 %v1778
      %v1780 = vperm.slane %v1772, %v1779
      %v1781 = vrot.slane %v1764, 4
      %v1782 = vsel %vm935, 0.0, %v1781
      %v1783 = vrot.slane %v1768, 4
      %v1784 = vsel %vm935, 0.0, %v1783
      %v1785 = vrot.slane %v1776, 4
      %v1786 = vsel %vm935, 0.0, %v1785
      %v1787 = vrot.slane %v1780, 4
      %v1788 = vsel %vm935, 0.0, %v1787
      %v1789 = vrot.slane %v1706, 4
      %v1790 = vsel %vm935, 0.0, %v1789
      %v1792 = vunpack.c.l.s4 1983009808
      %v1793 = vunpack.c.0.s8 %v1792
      %v1794 = vperm.slane %v1706, %v1793
      %v1796 = vunpack.c.l.s4 1983009808
      %v1797 = vunpack.c.0.s8 %v1796
      %v1798 = vperm.slane %v1790, %v1797
      %v1799 = vrot.slane %v1736, 4
      %v1800 = vsel %vm935, 0.0, %v1799
      %v1802 = vunpack.c.l.s4 1983009808
      %v1803 = vunpack.c.0.s8 %v1802
      %v1804 = vperm.slane %v1736, %v1803
      %v1806 = vunpack.c.l.s4 1983009808
      %v1807 = vunpack.c.0.s8 %v1806
      %v1808 = vperm.slane %v1800, %v1807
      %v1809 = vrot.slane %v1804, 4
      %v1810 = vsel %vm935, %v1809, %v1794
      %v1811 = vrot.slane %v1794, 4
      %v1812 = vsel %vm935, %v1804, %v1811
      %v1814 = vunpack.c.l.s4 1934713408
      %v1815 = vunpack.c.0.s8 %v1814
      %v1816 = vperm.slane %v1810, %v1815
      %v1818 = vunpack.c.l.s4 1934713408
      %v1819 = vunpack.c.0.s8 %v1818
      %v1820 = vperm.slane %v1812, %v1819
      %v1821 = vrot.slane %v1808, 4
      %v1822 = vsel %vm935, %v1821, %v1798
      %v1823 = vrot.slane %v1798, 4
      %v1824 = vsel %vm935, %v1808, %v1823
      %v1826 = vunpack.c.l.s4 1934713408
      %v1827 = vunpack.c.0.s8 %v1826
      %v1828 = vperm.slane %v1822, %v1827
      %v1830 = vunpack.c.l.s4 1934713408
      %v1831 = vunpack.c.0.s8 %v1830
      %v1832 = vperm.slane %v1824, %v1831
      %v1833 = vrot.slane %v1816, 4
      %v1834 = vsel %vm935, 0.0, %v1833
      %v1835 = vrot.slane %v1820, 4
      %v1836 = vsel %vm935, 0.0, %v1835
      %v1837 = vrot.slane %v1828, 4
      %v1838 = vsel %vm935, 0.0, %v1837
      %v1839 = vrot.slane %v1832, 4
      %v1840 = vsel %vm935, 0.0, %v1839
      %v1841 = vsel %vm935, %v1783, %v1764
      %v1843 = vunpack.c.l.s4 1983009808
      %v1844 = vunpack.c.0.s8 %v1843
      %v1845 = vperm.slane %v1841, %v1844
      %v1846 = vrot.slane %v1784, 4
      %v1847 = vsel %vm935, %v1846, %v1782
      %v1849 = vunpack.c.l.s4 1983009808
      %v1850 = vunpack.c.0.s8 %v1849
      %v1851 = vperm.slane %v1847, %v1850
      %v1852 = vsel %vm935, %v1787, %v1776
      %v1854 = vunpack.c.l.s4 1983009808
      %v1855 = vunpack.c.0.s8 %v1854
      %v1856 = vperm.slane %v1852, %v1855
      %v1857 = vrot.slane %v1788, 4
      %v1858 = vsel %vm935, %v1857, %v1786
      %v1860 = vunpack.c.l.s4 1983009808
      %v1861 = vunpack.c.0.s8 %v1860
      %v1862 = vperm.slane %v1858, %v1861
      %v1863 = vrot.slane %v1851, 4
      %v1864 = vsel %vm935, %v1863, %v1845
      %v1866 = vunpack.c.l.s4 1934713408
      %v1867 = vunpack.c.0.s8 %v1866
      %v1868 = vperm.slane %v1864, %v1867
      %v1869 = vrot.slane %v1862, 4
      %v1870 = vsel %vm935, %v1869, %v1856
      %v1872 = vunpack.c.l.s4 1934713408
      %v1873 = vunpack.c.0.s8 %v1872
      %v1874 = vperm.slane %v1870, %v1873
      %v1875 = vrot.slane %v1874, 4
      %v1876 = vsel %vm935, %v1875, %v1868
      %v1877 = vrot.slane %v1868, 4
      %v1878 = vsel %vm935, %v1874, %v1877
      %v1879 = vsel %vm935, %v1835, %v1816
      %v1881 = vunpack.c.l.s4 1983009808
      %v1882 = vunpack.c.0.s8 %v1881
      %v1883 = vperm.slane %v1879, %v1882
      %v1884 = vrot.slane %v1836, 4
      %v1885 = vsel %vm935, %v1884, %v1834
      %v1887 = vunpack.c.l.s4 1983009808
      %v1888 = vunpack.c.0.s8 %v1887
      %v1889 = vperm.slane %v1885, %v1888
      %v1890 = vsel %vm935, %v1839, %v1828
      %v1892 = vunpack.c.l.s4 1983009808
      %v1893 = vunpack.c.0.s8 %v1892
      %v1894 = vperm.slane %v1890, %v1893
      %v1895 = vrot.slane %v1840, 4
      %v1896 = vsel %vm935, %v1895, %v1838
      %v1898 = vunpack.c.l.s4 1983009808
      %v1899 = vunpack.c.0.s8 %v1898
      %v1900 = vperm.slane %v1896, %v1899
      %v1901 = vrot.slane %v1889, 4
      %v1902 = vsel %vm935, %v1901, %v1883
      %v1904 = vunpack.c.l.s4 1934713408
      %v1905 = vunpack.c.0.s8 %v1904
      %v1906 = vperm.slane %v1902, %v1905
      %v1907 = vrot.slane %v1900, 4
      %v1908 = vsel %vm935, %v1907, %v1894
      %v1910 = vunpack.c.l.s4 1934713408
      %v1911 = vunpack.c.0.s8 %v1910
      %v1912 = vperm.slane %v1908, %v1911
      %v1913 = vrot.slane %v1912, 4
      %v1914 = vsel %vm935, %v1913, %v1906
      %v1915 = vrot.slane %v1906, 4
      %v1916 = vsel %vm935, %v1912, %v1915
      %1919 = vrot.lane.b32.xlu0 %v1878, 32
      %v1920 = vpop.permute.xlu0 %1919
      %1921 = vrot.lane.b32.xlu0 %v1916, 32
      %v1922 = vpop.permute.xlu0 %1921
      %v1925 = vsel %vm1517, %v1876, %v1920
      %v1926 = vsel %vm1517, %v1914, %v1922
      %v1927 = vld [vmem:[#allocation4] sm:$0xff]
      %v1928 = vld [vmem:[#allocation4 + $0x8] sm:$0xff]
      %v1929 = vpack.c.bf16 %v1926, %v1925
      %s1930 = smul.u32 %s31, 8
      %s1931 = smul.addr %s1930, 4
      %s1932 = scalar_lea.vmem %s673, %s1931
      %v1933 = vld [vmem:[%s1932] sm:$0xf]
      %v1934 = vld [vmem:[%s1932 + $0x4] sm:$0xf]
      %v1935 = vld [vmem:[%s1932 + $0x8] sm:$0xf]
      %v1936 = vld [vmem:[%s1932 + $0xc] sm:$0xf]
      %v1937 = vld [vmem:[%s1932 + $0x10] sm:$0xf]
      %v1938 = vld [vmem:[%s1932 + $0x14] sm:$0xf]
      %v1939 = vld [vmem:[%s1932 + $0x18] sm:$0xf]
      %v1940 = vld [vmem:[%s1932 + $0x1c] sm:$0xf]
      %v1949 = vunpack.c.l.b16 %v1933
      %v1950 = vunpack.c.l.b16 %v1934
      %v1951 = vunpack.c.l.b16 %v1935
      %v1952 = vunpack.c.l.b16 %v1936
      %v1953 = vunpack.c.l.b16 %v1937
      %v1954 = vunpack.c.l.b16 %v1938
      %v1955 = vunpack.c.l.b16 %v1939
      %v1956 = vunpack.c.l.b16 %v1940
      %v1957 = vpack.c.b16 %v1950, %v1949
      %v1958 = vpack.c.b16 %v1952, %v1951
      %v1959 = vpack.c.b16 %v1954, %v1953
      %v1960 = vpack.c.b16 %v1956, %v1955
      %vm1965 = vcmask 523264
      %v1967 = vsel %vm1965, %v1929, 0
      %1969 = vmatpush.bf16.msra.mxu0 0
      %1970 = vmatpush.bf16.msra.mxu0 0
      %1971 = vmatpush.bf16.msra.mxu0 0
      %1972 = vmatpush.bf16.msra.mxu0 0
      %1973 = vmatpush.bf16.msra.mxu0 %v1960
      %1974 = vmatpush.bf16.msra.mxu0 %v1959
      %1975 = vmatpush.bf16.msra.mxu0 %v1958
      %1976 = vmatpush.bf16.msra.mxu0 %v1957
      %1977 = vmatmul.bf16.gmra.mxu0 %v1967
      %v1978 = vpop.f32.mrf.mxu0
      %v1979 = vadd.f32 0.0, %v1978
      %v1980 = vpop.f32.mrf.mxu0
      %v1981 = vadd.f32 0.0, %v1980
      %1982 = vdwg.mxu0
      %v1983 = vadd.f32 %v1927, %v1979
      %v1984 = vadd.f32 %v1928, %v1981
      %1985 = vst [vmem:[#allocation4] sm:$0xff] %v1983
      %1986 = vst [vmem:[#allocation4 + $0x8] sm:$0xff] %v1984
      %p1987 = scmp.eq.s32.totalorder %s31, 1
      // Predicated region
      $region81: #{psm_encoder_forward.1} parent=71 // pred_check
        %p1988 = pneg %p1987
      $region82: #{psm_encoder_forward.1} parent=71 // pred_check_branch
        %1990 = sbr.rel (%p1988) target = $region84
      $region83: #{psm_encoder_forward.1} parent=71 // pred_region
        %s1991 = smul.u32 %s30, 16
        %s1992 = scalar_lea.vmem [#allocation2], %s1991
        %v1993 = vld [vmem:[%s1992] sm:$0xff]
        %v1994 = vld [vmem:[%s1992 + $0x8] sm:$0xff]
        %v1995 = vld [vmem:[#allocation4] sm:$0xff]
        %v1996 = vld [vmem:[#allocation4 + $0x8] sm:$0xff]
        %v1997 = vadd.f32 %v1993, %v1995
        %v1998 = vadd.f32 %v1994, %v1996
        %v1999 = vld [vmem:[%s676] sm:$0x1]
        %v2001 = vperm.slane %v1999, 0
        %v2003 = vadd.f32 %v1997, %v2001
        %v2004 = vadd.f32 %v1998, %v2001
        %v2005 = vld [vmem:[%s680] sm:$0x3]
        %2006 = vadd.xlane.f32.xlu0 %v2003
        %v2007 = vpop.xlane.xlu0 %2006
        %2008 = vadd.xlane.f32.xlu0 %v2004
        %v2009 = vpop.xlane.xlu0 %2008
        %v2010 = vrcp.pop 128.0
        %v2011 = vmul.f32 128.0, %v2010
        %v2012 = vsub.f32 1.0, %v2011
        %v2013 = vmul.f32 %v2010, %v2012
        %v2014 = vadd.f32 %v2010, %v2013
        %vm2015 = vweird.f32 %v2010
        %v2016 = vsel %vm2015, %v2010, %v2014
        %v2017 = vmul.f32 %v2007, %v2016
        %v2018 = vmul.f32 %v2009, %v2016
        %v2019 = vsub.f32 %v2003, %v2017
        %v2020 = vsub.f32 %v2004, %v2018
        %v2021 = vmul.f32 %v2019, %v2019
        %v2022 = vmul.f32 %v2020, %v2020
        %2023 = vadd.xlane.f32.xlu0 %v2021
        %v2024 = vpop.xlane.xlu0 %2023
        %2025 = vadd.xlane.f32.xlu0 %v2022
        %v2026 = vpop.xlane.xlu0 %2025
        %v2027 = vmul.f32 %v2024, %v2016
        %v2028 = vmul.f32 %v2026, %v2016
        %v2029 = vadd.f32 %v2027, 1e-05
        %v2030 = vadd.f32 %v2028, 1e-05
        %v2031 = vrsqrt.pop %v2029
        %v2032 = vmul.f32 %v2031, %v2029
        %v2033 = vmul.f32 %v2032, %v2031
        %v2034 = vmul.f32 0.5, %v2033
        %v2035 = vsub.f32 1.5, %v2034
        %v2036 = vmul.f32 %v2031, %v2035
        %vm2037 = vweird.f32 %v2029
        %vm2038 = vweird.f32 %v2031
        %vm2039 = vmor %vm2037, %vm2038
        %v2040 = vsel %vm2039, %v2031, %v2036
        %v2041 = vrsqrt.pop %v2030
        %v2042 = vmul.f32 %v2041, %v2030
        %v2043 = vmul.f32 %v2042, %v2041
        %v2044 = vmul.f32 0.5, %v2043
        %v2045 = vsub.f32 1.5, %v2044
        %v2046 = vmul.f32 %v2041, %v2045
        %vm2047 = vweird.f32 %v2030
        %vm2048 = vweird.f32 %v2041
        %vm2049 = vmor %vm2047, %vm2048
        %v2050 = vsel %vm2049, %v2041, %v2046
        %v2051 = vmul.f32 %v2019, %v2040
        %v2052 = vmul.f32 %v2020, %v2050
        %v2053 = vperm.slane %v2005, 0
        %v2054 = vmul.f32 %v2051, %v2053
        %v2055 = vmul.f32 %v2052, %v2053
        %v2056 = vperm.slane %v2005, 1
        %v2057 = vadd.f32 %v2054, %v2056
        %v2058 = vadd.f32 %v2055, %v2056
        %v2059 = vpack.c.bf16 %v2058, %v2057
        %v2060 = vld [vmem:[%s685] sm:$0xff]
        %v2061 = vld [vmem:[%s685 + $0x8] sm:$0xff]
        %v2062 = vld [vmem:[%s685 + $0x10] sm:$0xff]
        %v2063 = vld [vmem:[%s685 + $0x18] sm:$0xff]
        %v2064 = vld [vmem:[%s685 + $0x20] sm:$0xff]
        %v2065 = vld [vmem:[%s685 + $0x28] sm:$0xff]
        %v2066 = vld [vmem:[%s685 + $0x30] sm:$0xff]
        %v2067 = vld [vmem:[%s685 + $0x38] sm:$0xff]
        %v2068 = vld [vmem:[%s685 + $0x40] sm:$0xff]
        %v2069 = vld [vmem:[%s685 + $0x48] sm:$0xff]
        %v2070 = vld [vmem:[%s685 + $0x50] sm:$0xff]
        %v2071 = vld [vmem:[%s685 + $0x58] sm:$0xff]
        %v2072 = vld [vmem:[%s685 + $0x60] sm:$0xff]
        %v2073 = vld [vmem:[%s685 + $0x68] sm:$0xff]
        %v2074 = vld [vmem:[%s685 + $0x70] sm:$0xff]
        %v2075 = vld [vmem:[%s685 + $0x78] sm:$0xff]
        %v2076 = vld [vmem:[%s689] sm:$0x3]
        %v2078 = vperm.slane %v2076, 0
        %v2079 = vperm.slane %v2076, 1
        %v2098 = vunpack.c.l.b16 %v2060
        %v2099 = vunpack.c.h.b16 %v2060
        %v2100 = vunpack.c.l.b16 %v2061
        %v2101 = vunpack.c.h.b16 %v2061
        %v2102 = vunpack.c.l.b16 %v2062
        %v2103 = vunpack.c.h.b16 %v2062
        %v2104 = vunpack.c.l.b16 %v2063
        %v2105 = vunpack.c.h.b16 %v2063
        %v2106 = vunpack.c.l.b16 %v2064
        %v2107 = vunpack.c.h.b16 %v2064
        %v2108 = vunpack.c.l.b16 %v2065
        %v2109 = vunpack.c.h.b16 %v2065
        %v2110 = vunpack.c.l.b16 %v2066
        %v2111 = vunpack.c.h.b16 %v2066
        %v2112 = vunpack.c.l.b16 %v2067
        %v2113 = vunpack.c.h.b16 %v2067
        %v2114 = vunpack.c.l.b16 %v2068
        %v2115 = vunpack.c.h.b16 %v2068
        %v2116 = vunpack.c.l.b16 %v2069
        %v2117 = vunpack.c.h.b16 %v2069
        %v2118 = vunpack.c.l.b16 %v2070
        %v2119 = vunpack.c.h.b16 %v2070
        %v2120 = vunpack.c.l.b16 %v2071
        %v2121 = vunpack.c.h.b16 %v2071
        %v2122 = vunpack.c.l.b16 %v2072
        %v2123 = vunpack.c.h.b16 %v2072
        %v2124 = vunpack.c.l.b16 %v2073
        %v2125 = vunpack.c.h.b16 %v2073
        %v2126 = vunpack.c.l.b16 %v2074
        %v2127 = vunpack.c.h.b16 %v2074
        %v2128 = vunpack.c.l.b16 %v2075
        %v2129 = vunpack.c.h.b16 %v2075
        %v2130 = vpack.c.b16 %v2100, %v2098
        %v2131 = vpack.c.b16 %v2101, %v2099
        %v2132 = vpack.c.b16 %v2104, %v2102
        %v2133 = vpack.c.b16 %v2105, %v2103
        %v2134 = vpack.c.b16 %v2108, %v2106
        %v2135 = vpack.c.b16 %v2109, %v2107
        %v2136 = vpack.c.b16 %v2112, %v2110
        %v2137 = vpack.c.b16 %v2113, %v2111
        %v2138 = vpack.c.b16 %v2116, %v2114
        %v2139 = vpack.c.b16 %v2117, %v2115
        %v2140 = vpack.c.b16 %v2120, %v2118
        %v2141 = vpack.c.b16 %v2121, %v2119
        %v2142 = vpack.c.b16 %v2124, %v2122
        %v2143 = vpack.c.b16 %v2125, %v2123
        %v2144 = vpack.c.b16 %v2128, %v2126
        %v2145 = vpack.c.b16 %v2129, %v2127
        %2162 = vmatpush.bf16.msra.mxu0 %v2144
        %2163 = vmatpush.bf16.msra.mxu0 %v2142
        %2164 = vmatpush.bf16.msra.mxu0 %v2140
        %2165 = vmatpush.bf16.msra.mxu0 %v2138
        %2166 = vmatpush.bf16.msra.mxu0 %v2136
        %2167 = vmatpush.bf16.msra.mxu0 %v2134
        %2168 = vmatpush.bf16.msra.mxu0 %v2132
        %2169 = vmatpush.bf16.msra.mxu0 %v2130
        %2170 = vmatmul.bf16.gmra.mxu0 %v2059
        %v2171 = vpop.f32.mrf.mxu0
        %v2172 = vadd.f32 %v2078, %v2171
        %v2173 = vpop.f32.mrf.mxu0
        %v2174 = vadd.f32 %v2078, %v2173
        %2175 = vdwg.mxu0
        %2176 = vmatpush.bf16.msra.mxu0 %v2145
        %2177 = vmatpush.bf16.msra.mxu0 %v2143
        %2178 = vmatpush.bf16.msra.mxu0 %v2141
        %2179 = vmatpush.bf16.msra.mxu0 %v2139
        %2180 = vmatpush.bf16.msra.mxu0 %v2137
        %2181 = vmatpush.bf16.msra.mxu0 %v2135
        %2182 = vmatpush.bf16.msra.mxu0 %v2133
        %2183 = vmatpush.bf16.msra.mxu0 %v2131
        %2184 = vmatmul.bf16.gmra.mxu0 %v2059
        %v2185 = vpop.f32.mrf.mxu0
        %v2186 = vadd.f32 %v2079, %v2185
        %v2187 = vpop.f32.mrf.mxu0
        %v2188 = vadd.f32 %v2079, %v2187
        %2189 = vdwg.mxu0
        %v2190 = vmul.f32 %v2172, 0.5
        %v2191 = vmul.f32 %v2186, 0.5
        %v2192 = vmul.f32 %v2174, 0.5
        %v2193 = vmul.f32 %v2188, 0.5
        %v2194 = vmul.f32 %v2172, 0.044715
        %v2195 = vmul.f32 %v2186, 0.044715
        %v2196 = vmul.f32 %v2174, 0.044715
        %v2197 = vmul.f32 %v2188, 0.044715
        %v2198 = vmul.f32 %v2194, %v2172
        %v2199 = vmul.f32 %v2195, %v2186
        %v2200 = vmul.f32 %v2196, %v2174
        %v2201 = vmul.f32 %v2197, %v2188
        %v2202 = vmul.f32 %v2198, %v2172
        %v2203 = vmul.f32 %v2199, %v2186
        %v2204 = vmul.f32 %v2200, %v2174
        %v2205 = vmul.f32 %v2201, %v2188
        %v2206 = vadd.f32 %v2172, %v2202
        %v2207 = vadd.f32 %v2186, %v2203
        %v2208 = vadd.f32 %v2174, %v2204
        %v2209 = vadd.f32 %v2188, %v2205
        %v2210 = vmul.f32 %v2206, 0.7978846
        %v2211 = vmul.f32 %v2207, 0.7978846
        %v2212 = vmul.f32 %v2208, 0.7978846
        %v2213 = vmul.f32 %v2209, 0.7978846
        %v2214 = vtanh.pop %v2210
        %v2215 = vtanh.pop %v2211
        %v2216 = vtanh.pop %v2212
        %v2217 = vtanh.pop %v2213
        %v2218 = vadd.f32 %v2214, 1.0
        %v2219 = vadd.f32 %v2215, 1.0
        %v2220 = vadd.f32 %v2216, 1.0
        %v2221 = vadd.f32 %v2217, 1.0
        %v2222 = vmul.f32 %v2190, %v2218
        %v2223 = vmul.f32 %v2191, %v2219
        %v2224 = vmul.f32 %v2192, %v2220
        %v2225 = vmul.f32 %v2193, %v2221
        %v2226 = vpack.c.bf16 %v2224, %v2222
        %v2227 = vpack.c.bf16 %v2225, %v2223
        %v2228 = vld [vmem:[%s694] sm:$0xf]
        %v2229 = vld [vmem:[%s694 + $0x4] sm:$0xf]
        %v2230 = vld [vmem:[%s694 + $0x8] sm:$0xf]
        %v2231 = vld [vmem:[%s694 + $0xc] sm:$0xf]
        %v2232 = vld [vmem:[%s694 + $0x10] sm:$0xf]
        %v2233 = vld [vmem:[%s694 + $0x14] sm:$0xf]
        %v2234 = vld [vmem:[%s694 + $0x18] sm:$0xf]
        %v2235 = vld [vmem:[%s694 + $0x1c] sm:$0xf]
        %v2236 = vld [vmem:[%s694 + $0x20] sm:$0xf]
        %v2237 = vld [vmem:[%s694 + $0x24] sm:$0xf]
        %v2238 = vld [vmem:[%s694 + $0x28] sm:$0xf]
        %v2239 = vld [vmem:[%s694 + $0x2c] sm:$0xf]
        %v2240 = vld [vmem:[%s694 + $0x30] sm:$0xf]
        %v2241 = vld [vmem:[%s694 + $0x34] sm:$0xf]
        %v2242 = vld [vmem:[%s694 + $0x38] sm:$0xf]
        %v2243 = vld [vmem:[%s694 + $0x3c] sm:$0xf]
        %v2244 = vld [vmem:[%s694 + $0x40] sm:$0xf]
        %v2245 = vld [vmem:[%s694 + $0x44] sm:$0xf]
        %v2246 = vld [vmem:[%s694 + $0x48] sm:$0xf]
        %v2247 = vld [vmem:[%s694 + $0x4c] sm:$0xf]
        %v2248 = vld [vmem:[%s694 + $0x50] sm:$0xf]
        %v2249 = vld [vmem:[%s694 + $0x54] sm:$0xf]
        %v2250 = vld [vmem:[%s694 + $0x58] sm:$0xf]
        %v2251 = vld [vmem:[%s694 + $0x5c] sm:$0xf]
        %v2252 = vld [vmem:[%s694 + $0x60] sm:$0xf]
        %v2253 = vld [vmem:[%s694 + $0x64] sm:$0xf]
        %v2254 = vld [vmem:[%s694 + $0x68] sm:$0xf]
        %v2255 = vld [vmem:[%s694 + $0x6c] sm:$0xf]
        %v2256 = vld [vmem:[%s694 + $0x70] sm:$0xf]
        %v2257 = vld [vmem:[%s694 + $0x74] sm:$0xf]
        %v2258 = vld [vmem:[%s694 + $0x78] sm:$0xf]
        %v2259 = vld [vmem:[%s694 + $0x7c] sm:$0xf]
        %v2292 = vunpack.c.l.b16 %v2228
        %v2293 = vunpack.c.l.b16 %v2229
        %v2294 = vunpack.c.l.b16 %v2230
        %v2295 = vunpack.c.l.b16 %v2231
        %v2296 = vunpack.c.l.b16 %v2232
        %v2297 = vunpack.c.l.b16 %v2233
        %v2298 = vunpack.c.l.b16 %v2234
        %v2299 = vunpack.c.l.b16 %v2235
        %v2300 = vunpack.c.l.b16 %v2236
        %v2301 = vunpack.c.l.b16 %v2237
        %v2302 = vunpack.c.l.b16 %v2238
        %v2303 = vunpack.c.l.b16 %v2239
        %v2304 = vunpack.c.l.b16 %v2240
        %v2305 = vunpack.c.l.b16 %v2241
        %v2306 = vunpack.c.l.b16 %v2242
        %v2307 = vunpack.c.l.b16 %v2243
        %v2308 = vunpack.c.l.b16 %v2244
        %v2309 = vunpack.c.l.b16 %v2245
        %v2310 = vunpack.c.l.b16 %v2246
        %v2311 = vunpack.c.l.b16 %v2247
        %v2312 = vunpack.c.l.b16 %v2248
        %v2313 = vunpack.c.l.b16 %v2249
        %v2314 = vunpack.c.l.b16 %v2250
        %v2315 = vunpack.c.l.b16 %v2251
        %v2316 = vunpack.c.l.b16 %v2252
        %v2317 = vunpack.c.l.b16 %v2253
        %v2318 = vunpack.c.l.b16 %v2254
        %v2319 = vunpack.c.l.b16 %v2255
        %v2320 = vunpack.c.l.b16 %v2256
        %v2321 = vunpack.c.l.b16 %v2257
        %v2322 = vunpack.c.l.b16 %v2258
        %v2323 = vunpack.c.l.b16 %v2259
        %v2324 = vpack.c.b16 %v2293, %v2292
        %v2325 = vpack.c.b16 %v2295, %v2294
        %v2326 = vpack.c.b16 %v2297, %v2296
        %v2327 = vpack.c.b16 %v2299, %v2298
        %v2328 = vpack.c.b16 %v2301, %v2300
        %v2329 = vpack.c.b16 %v2303, %v2302
        %v2330 = vpack.c.b16 %v2305, %v2304
        %v2331 = vpack.c.b16 %v2307, %v2306
        %v2332 = vpack.c.b16 %v2309, %v2308
        %v2333 = vpack.c.b16 %v2311, %v2310
        %v2334 = vpack.c.b16 %v2313, %v2312
        %v2335 = vpack.c.b16 %v2315, %v2314
        %v2336 = vpack.c.b16 %v2317, %v2316
        %v2337 = vpack.c.b16 %v2319, %v2318
        %v2338 = vpack.c.b16 %v2321, %v2320
        %v2339 = vpack.c.b16 %v2323, %v2322
        %2356 = vmatpush.bf16.msra.mxu0 %v2331
        %2357 = vmatpush.bf16.msra.mxu0 %v2330
        %2358 = vmatpush.bf16.msra.mxu0 %v2329
        %2359 = vmatpush.bf16.msra.mxu0 %v2328
        %2360 = vmatpush.bf16.msra.mxu0 %v2327
        %2361 = vmatpush.bf16.msra.mxu0 %v2326
        %2362 = vmatpush.bf16.msra.mxu0 %v2325
        %2363 = vmatpush.bf16.msra.mxu0 %v2324
        %2364 = vmatmul.bf16.gmra.mxu0 %v2226
        %v2365 = vpop.f32.mrf.mxu0
        %v2366 = vadd.f32 0.0, %v2365
        %v2367 = vpop.f32.mrf.mxu0
        %v2368 = vadd.f32 0.0, %v2367
        %2369 = vdwg.mxu0
        %2370 = vmatpush.bf16.msra.mxu0 %v2339
        %2371 = vmatpush.bf16.msra.mxu0 %v2338
        %2372 = vmatpush.bf16.msra.mxu0 %v2337
        %2373 = vmatpush.bf16.msra.mxu0 %v2336
        %2374 = vmatpush.bf16.msra.mxu0 %v2335
        %2375 = vmatpush.bf16.msra.mxu0 %v2334
        %2376 = vmatpush.bf16.msra.mxu0 %v2333
        %2377 = vmatpush.bf16.msra.mxu0 %v2332
        %2378 = vmatmul.bf16.gmra.mxu0 %v2227
        %v2379 = vpop.f32.mrf.mxu0
        %v2380 = vadd.f32 %v2366, %v2379
        %v2381 = vpop.f32.mrf.mxu0
        %v2382 = vadd.f32 %v2368, %v2381
        %2383 = vdwg.mxu0
        %v2384 = vadd.f32 %v2003, %v2380
        %v2385 = vadd.f32 %v2004, %v2382
        %v2386 = vld [vmem:[%s697] sm:$0x1]
        %v2388 = vperm.slane %v2386, 0
        %v2390 = vadd.f32 %v2384, %v2388
        %v2391 = vadd.f32 %v2385, %v2388
        %2392 = vst [vmem:[%s1992] sm:$0xff] %v2390
        %2393 = vst [vmem:[%s1992 + $0x8] sm:$0xff] %v2391
        %2394 = vst [vmem:[%s702] sm:$0xff] %v2390
        %2395 = vst [vmem:[%s702 + $0x8] sm:$0xff] %v2391
      $region84: #{psm_encoder_forward.1} parent=71 // pred_fallthru
        _
      %p2396 = scmp.lt.s32.totalorder %s30, 1
      %s2397 = scalar_select %p2396, %s30, 1
      %s2398 = smul.addr %s2397, 2
      %s2399 = smul.addr %s2398, 8
      %s2400 = scalar_lea.vmem %s13, %s2399
      // Predicated region
      $region85: #{psm_encoder_forward.1} parent=71 // pred_check
        %p2401 = pneg %p403
      $region86: #{psm_encoder_forward.1} parent=71 // pred_check_branch
        %2403 = sbr.rel (%p2401) target = $region88
      $region87: #{psm_encoder_forward.1} parent=71 // pred_region
        _
      $region88: #{psm_encoder_forward.1} parent=71 // pred_fallthru
        _
    $region72: #{psm_encoder_forward.1} parent=5 // pred_fallthru
      _
    %p2404 = scmp.le.s32.totalorder 2, %s19
    // Predicated region
    $region89: #{psm_encoder_forward.1} parent=5 // pred_check
      %p2405 = pneg %p2404
    $region90: #{psm_encoder_forward.1} parent=5 // pred_check_branch
      %2407 = sbr.rel (%p2405) target = $region92
    $region91: #{psm_encoder_forward.1} parent=5 // pred_region
      %s2408 = ssub.s32 %s19, 2
      // Predicated region
      $region93: #{psm_encoder_forward.1} parent=91 // pred_check
        %p2409 = pneg %p409
      $region94: #{psm_encoder_forward.1} parent=91 // pred_check_branch
        %2411 = sbr.rel (%p2409) target = $region96
      $region95: #{psm_encoder_forward.1} parent=91 // pred_region
        %p2412 = scmp.lt.s32.totalorder %s33, 1
        %s2413 = scalar_select %p2412, %s33, 1
        %s2414 = smul.addr %s2413, 2
        %s2415 = smul.addr %s2414, 8
        %s2416 = scalar_lea.vmem %s13, %s2415
      $region96: #{psm_encoder_forward.1} parent=91 // pred_fallthru
        _
    $region92: #{psm_encoder_forward.1} parent=5 // pred_fallthru
      _
  $region6: #{psm_encoder_forward.1} parent=0 // loop_footer
    %s23 = sadd.s32 1, %s19
  $region7: #{psm_encoder_forward.1} parent=0 // loop_footer_branch
    %18 = sbr.rel target = $region3
  $region8: #{psm_encoder_forward.1} parent=0 // loop_exit
    _

</llo_original>
